<compile_context>
chip_gen: v7x
topology: tpu7x:2x2x1
jax: 0.10.0
libtpu: 0.0.40
codegen_flags: <defaults>
</compile_context>

<pallas_src>
import math

import jax
import jax.numpy as jnp
from jax import lax
from jax.experimental import pallas as pl
from jax.experimental.pallas import tpu as pltpu


# ----------------------------------------------------------------------------
# Fused kernel: adjacency build + gcn_norm + 3 GCN layers + ReLU + dropout
# ----------------------------------------------------------------------------
def _net_fused_kernel(dst_ref, src_ref, x_ref, m1_ref, m2_ref,
                      w1_ref, b1_ref, w2_ref, b2_ref, w3_ref, b3_ref,
                      o_ref):
    n = x_ref.shape[0]          # padded node count (multiple of 128)
    e = dst_ref.shape[1]        # padded edge count (multiple of 128)
    f32 = jnp.float32
    bf16 = jnp.bfloat16

    # ---- dense adjacency from edge ids: adj[i, j] = #edges j -> i -----------
    # One-hots built directly in the layouts the matmul wants (no transpose):
    #   dst_oh  (N, E): dst_oh[i, k]  = (dst[k] == i)
    #   src_ohT (E, N): src_ohT[k, j] = (src[k] == j)
    dst_oh = (lax.broadcasted_iota(jnp.int32, (n, e), 0)
              == dst_ref[...]).astype(bf16)                       # (N, E)
    src_ohT = (lax.broadcasted_iota(jnp.int32, (e, n), 1)
               == src_ref[...]).astype(bf16)                      # (E, N)
    adj = jnp.dot(dst_oh, src_ohT, preferred_element_type=f32)    # (N, N) exact

    # ---- gcn_norm: add remaining self loops + symmetric degree norm ---------
    rows = lax.broadcasted_iota(jnp.int32, (n, n), 0)
    cols = lax.broadcasted_iota(jnp.int32, (n, n), 1)
    eye = (rows == cols).astype(f32)
    has_self = jnp.sum(adj * eye, axis=1, keepdims=True)          # (N, 1)
    a = adj + eye * jnp.where(has_self > 0.0, 0.0, 1.0)           # A + remaining I

    # Fold D^{-1/2} (A+I) D^{-1/2} into a single resident matrix a_hat.
    # Row/column sums coincide for the symmetrized edge_index used here, so this
    # matches torch_geometric's gcn_norm exactly (padded rows have deg == 1).
    dinv_c = lax.rsqrt(jnp.sum(a, axis=1, keepdims=True))         # (N, 1)
    dinv_r = lax.rsqrt(jnp.sum(a, axis=0, keepdims=True))         # (1, N)
    a_hat = a * dinv_c * dinv_r                                   # (N, N) f32

    def gcn(h, w_ref, b_ref):
        # a_hat @ (h @ W) + b  — normalization already folded into a_hat.
        sup = jnp.dot(h, w_ref[...], preferred_element_type=f32)
        return jnp.dot(a_hat, sup, preferred_element_type=f32) + b_ref[...]

    # Dropout masks hold {0.0, 2.0} (keep-prob 0.5, 1/(1-p) rescale folded in),
    # so ReLU + dropout is one max + one multiply per layer.
    h = jnp.maximum(gcn(x_ref[...], w1_ref, b1_ref), 0.0) * m1_ref[...]
    h = jnp.maximum(gcn(h, w2_ref, b2_ref), 0.0) * m2_ref[...]
    o_ref[...] = gcn(h, w3_ref, b3_ref)


# ----------------------------------------------------------------------------
# pallas_call wrapper (single launch, no grid, everything resident in VMEM)
# ----------------------------------------------------------------------------
_VMEM = pl.BlockSpec(memory_space=pltpu.MemorySpace.VMEM)


def _round_up(v, m):
    return ((v + m - 1) // m) * m


def net_forward(params, x, edge_index, dropout_key):
    """x: (N, Cin) f32, edge_index: (2, E) int32 (symmetrized, as in the driver)."""
    n, cin = x.shape
    e = edge_index.shape[1]
    hid = params['w1'].shape[1]
    cout = params['w3'].shape[1]

    # Lane-dense padding: nodes & edges rounded up to multiples of 128.
    n_pad = _round_up(max(n, 128), 128)
    e_pad = _round_up(max(e, 128), 128)

    x_p = jnp.zeros((n_pad, cin), jnp.float32).at[:n].set(x)
    # Padded edges point at node -1 -> never match any node id (all-zero one-hot).
    dst_row = jnp.full((1, e_pad), -1, jnp.int32).at[0, :e].set(edge_index[1])
    src_col = jnp.full((e_pad, 1), -1, jnp.int32).at[:e, 0].set(edge_index[0])

    # Dropout(0.5, training=True) keep-masks with the 2x rescale pre-folded.
    k1, k2 = jax.random.split(dropout_key)
    m1 = jnp.where(jax.random.bernoulli(k1, 0.5, (n_pad, hid)), 2.0, 0.0
                   ).astype(jnp.float32)
    m2 = jnp.where(jax.random.bernoulli(k2, 0.5, (n_pad, hid)), 2.0, 0.0
                   ).astype(jnp.float32)

    out_pad = pl.pallas_call(
        _net_fused_kernel,
        out_shape=jax.ShapeDtypeStruct((n_pad, cout), jnp.float32),
        in_specs=[_VMEM] * 11,
        out_specs=_VMEM,
    )(dst_row, src_col, x_p, m1, m2,
      params['w1'], params['b1'], params['w2'], params['b2'],
      params['w3'], params['b3'])
    return out_pad[:n]


# ----------------------------------------------------------------------------
# Deterministic parameter construction (weights stored (in, out) for x @ W)
# ----------------------------------------------------------------------------
def make_params(key, cin, cout):
    hid = cin // 2
    ks = jax.random.split(key, 6)

    def lin(k, din, dout):
        return jax.random.normal(k, (din, dout), jnp.float32) / math.sqrt(din)

    return {
        'w1': lin(ks[0], cin, hid),
        'b1': jax.random.normal(ks[1], (1, hid), jnp.float32) * 0.01,
        'w2': lin(ks[2], hid, hid),
        'b2': jax.random.normal(ks[3], (1, hid), jnp.float32) * 0.01,
        'w3': lin(ks[4], hid, cout),
        'b3': jax.random.normal(ks[5], (1, cout), jnp.float32) * 0.01,
    }


# ----------------------------------------------------------------------------
if __name__ == "__main__":
    key = jax.random.PRNGKey(0)
    k_x, k_e, k_w, k_d = jax.random.split(key, 4)

    N, E_UND, CIN, COUT = 64, 128, 256, 128   # 128 undirected edges -> 256 directed

    x = jax.random.normal(k_x, (N, CIN), jnp.float32)

    # Random undirected graph, no self loops, symmetrized edge_index of shape (2, E).
    src = jax.random.randint(k_e, (E_UND,), 0, N, dtype=jnp.int32)
    off = jax.random.randint(jax.random.fold_in(k_e, 1), (E_UND,), 1, N, dtype=jnp.int32)
    dst = (src + off) % N
    edge_index = jnp.concatenate(
        [jnp.stack([src, dst], axis=0), jnp.stack([dst, src], axis=0)], axis=1)

    params = make_params(k_w, CIN, COUT)

    out = net_forward(params, x, edge_index, k_d)
    jax.block_until_ready(out)
    assert out.shape == (N, COUT) and out.dtype == jnp.float32
    assert bool(jnp.all(jnp.isfinite(out)))
    print("KERNEL_OK")
</pallas_src>

<mosaic_0001>
module attributes {stable_mosaic.version = 11 : i64} {
  func.func @_net_fused_kernel(%arg0: memref<1x256xi32, #tpu.memory_space<vmem>>, %arg1: memref<256x1xi32, #tpu.memory_space<vmem>>, %arg2: memref<128x256xf32, #tpu.memory_space<vmem>>, %arg3: memref<128x128xf32, #tpu.memory_space<vmem>>, %arg4: memref<128x128xf32, #tpu.memory_space<vmem>>, %arg5: memref<256x128xf32, #tpu.memory_space<vmem>>, %arg6: memref<1x128xf32, #tpu.memory_space<vmem>>, %arg7: memref<128x128xf32, #tpu.memory_space<vmem>>, %arg8: memref<1x128xf32, #tpu.memory_space<vmem>>, %arg9: memref<128x128xf32, #tpu.memory_space<vmem>>, %arg10: memref<1x128xf32, #tpu.memory_space<vmem>>, %arg11: memref<128x128xf32, #tpu.memory_space<vmem>>) attributes {dimension_semantics = [], scalar_prefetch = 0 : i64, scratch_operands = 0 : i64, tpu.core_type = #tpu.core_type<tc>} {
    %0 = tpu.iota {dimensions = array<i32: 0>} : vector<128x256xi32>
    %c0 = arith.constant 0 : index
    %c0_0 = arith.constant 0 : index
    %1 = vector.load %arg0[%c0, %c0_0] : memref<1x256xi32, #tpu.memory_space<vmem>>, vector<1x256xi32>
    %2 = vector.broadcast %1 : vector<1x256xi32> to vector<128x256xi32>
    %3 = arith.cmpi eq, %0, %2 : vector<128x256xi32>
    %4 = arith.extui %3 : vector<128x256xi1> to vector<128x256xi32>
    %5 = arith.sitofp %4 : vector<128x256xi32> to vector<128x256xf32>
    %6 = arith.truncf %5 : vector<128x256xf32> to vector<128x256xbf16>
    %7 = tpu.iota {dimensions = array<i32: 1>} : vector<256x128xi32>
    %c0_1 = arith.constant 0 : index
    %c0_2 = arith.constant 0 : index
    %8 = vector.load %arg1[%c0_1, %c0_2] : memref<256x1xi32, #tpu.memory_space<vmem>>, vector<256x1xi32>
    %9 = vector.broadcast %8 : vector<256x1xi32> to vector<256x128xi32>
    %10 = arith.cmpi eq, %7, %9 : vector<256x128xi32>
    %11 = arith.extui %10 : vector<256x128xi1> to vector<256x128xi32>
    %12 = arith.sitofp %11 : vector<256x128xi32> to vector<256x128xf32>
    %13 = arith.truncf %12 : vector<256x128xf32> to vector<256x128xbf16>
    %cst = arith.constant dense<0.000000e+00> : vector<128x128xf32>
    %14 = tpu.matmul %6, %13, %cst {dimension_numbers = #tpu.dot_dimension_numbers<[1], [0], [0], [1], [0, 0, 1, 1], [], []>} : vector<128x256xbf16>, vector<256x128xbf16>, vector<128x128xf32> -> vector<128x128xf32>
    %15 = tpu.iota {dimensions = array<i32: 0>} : vector<128x128xi32>
    %16 = tpu.iota {dimensions = array<i32: 1>} : vector<128x128xi32>
    %17 = arith.cmpi eq, %15, %16 : vector<128x128xi32>
    %18 = arith.extui %17 : vector<128x128xi1> to vector<128x128xi32>
    %19 = arith.sitofp %18 : vector<128x128xi32> to vector<128x128xf32>
    %20 = arith.mulf %14, %19 : vector<128x128xf32>
    %cst_3 = arith.constant dense<0.000000e+00> : vector<128xf32>
    %21 = vector.multi_reduction <add>, %20, %cst_3 [1] : vector<128x128xf32> to vector<128xf32>
    %22 = vector.shape_cast %21 : vector<128xf32> to vector<128x1xf32>
    %cst_4 = arith.constant 0.000000e+00 : f32
    %23 = vector.broadcast %cst_4 : f32 to vector<128x1xf32>
    %24 = arith.cmpf ogt, %22, %23 : vector<128x1xf32>
    %cst_5 = arith.constant 0.000000e+00 : f32
    %cst_6 = arith.constant 1.000000e+00 : f32
    %25 = vector.broadcast %cst_5 : f32 to vector<128x1xf32>
    %26 = vector.broadcast %cst_6 : f32 to vector<128x1xf32>
    %27 = arith.select %24, %25, %26 : vector<128x1xi1>, vector<128x1xf32>
    %28 = vector.broadcast %27 : vector<128x1xf32> to vector<128x128xf32>
    %29 = arith.mulf %19, %28 : vector<128x128xf32>
    %30 = arith.addf %14, %29 : vector<128x128xf32>
    %cst_7 = arith.constant dense<0.000000e+00> : vector<128xf32>
    %31 = vector.multi_reduction <add>, %30, %cst_7 [1] : vector<128x128xf32> to vector<128xf32>
    %32 = vector.shape_cast %31 : vector<128xf32> to vector<128x1xf32>
    %33 = math.rsqrt %32 : vector<128x1xf32>
    %cst_8 = arith.constant dense<0.000000e+00> : vector<128xf32>
    %34 = vector.multi_reduction <add>, %30, %cst_8 [0] : vector<128x128xf32> to vector<128xf32>
    %35 = vector.shape_cast %34 : vector<128xf32> to vector<1x128xf32>
    %36 = math.rsqrt %35 : vector<1x128xf32>
    %37 = vector.broadcast %33 : vector<128x1xf32> to vector<128x128xf32>
    %38 = arith.mulf %30, %37 : vector<128x128xf32>
    %39 = vector.broadcast %36 : vector<1x128xf32> to vector<128x128xf32>
    %40 = arith.mulf %38, %39 : vector<128x128xf32>
    %c0_9 = arith.constant 0 : index
    %c0_10 = arith.constant 0 : index
    %41 = vector.load %arg2[%c0_9, %c0_10] : memref<128x256xf32, #tpu.memory_space<vmem>>, vector<128x256xf32>
    %c0_11 = arith.constant 0 : index
    %c0_12 = arith.constant 0 : index
    %42 = vector.load %arg5[%c0_11, %c0_12] : memref<256x128xf32, #tpu.memory_space<vmem>>, vector<256x128xf32>
    %cst_13 = arith.constant dense<0.000000e+00> : vector<128x128xf32>
    %43 = tpu.matmul %41, %42, %cst_13 {dimension_numbers = #tpu.dot_dimension_numbers<[1], [0], [0], [1], [0, 0, 1, 1], [], []>} : vector<128x256xf32>, vector<256x128xf32>, vector<128x128xf32> -> vector<128x128xf32>
    %cst_14 = arith.constant dense<0.000000e+00> : vector<128x128xf32>
    %44 = tpu.matmul %40, %43, %cst_14 {dimension_numbers = #tpu.dot_dimension_numbers<[1], [0], [0], [1], [0, 0, 1, 1], [], []>} : vector<128x128xf32>, vector<128x128xf32>, vector<128x128xf32> -> vector<128x128xf32>
    %c0_15 = arith.constant 0 : index
    %c0_16 = arith.constant 0 : index
    %45 = vector.load %arg6[%c0_15, %c0_16] : memref<1x128xf32, #tpu.memory_space<vmem>>, vector<1x128xf32>
    %46 = vector.broadcast %45 : vector<1x128xf32> to vector<128x128xf32>
    %47 = arith.addf %44, %46 : vector<128x128xf32>
    %cst_17 = arith.constant 0.000000e+00 : f32
    %48 = vector.broadcast %cst_17 : f32 to vector<128x128xf32>
    %49 = arith.maximumf %47, %48 : vector<128x128xf32>
    %c0_18 = arith.constant 0 : index
    %c0_19 = arith.constant 0 : index
    %50 = vector.load %arg3[%c0_18, %c0_19] : memref<128x128xf32, #tpu.memory_space<vmem>>, vector<128x128xf32>
    %51 = arith.mulf %49, %50 : vector<128x128xf32>
    %c0_20 = arith.constant 0 : index
    %c0_21 = arith.constant 0 : index
    %52 = vector.load %arg7[%c0_20, %c0_21] : memref<128x128xf32, #tpu.memory_space<vmem>>, vector<128x128xf32>
    %cst_22 = arith.constant dense<0.000000e+00> : vector<128x128xf32>
    %53 = tpu.matmul %51, %52, %cst_22 {dimension_numbers = #tpu.dot_dimension_numbers<[1], [0], [0], [1], [0, 0, 1, 1], [], []>} : vector<128x128xf32>, vector<128x128xf32>, vector<128x128xf32> -> vector<128x128xf32>
    %cst_23 = arith.constant dense<0.000000e+00> : vector<128x128xf32>
    %54 = tpu.matmul %40, %53, %cst_23 {dimension_numbers = #tpu.dot_dimension_numbers<[1], [0], [0], [1], [0, 0, 1, 1], [], []>} : vector<128x128xf32>, vector<128x128xf32>, vector<128x128xf32> -> vector<128x128xf32>
    %c0_24 = arith.constant 0 : index
    %c0_25 = arith.constant 0 : index
    %55 = vector.load %arg8[%c0_24, %c0_25] : memref<1x128xf32, #tpu.memory_space<vmem>>, vector<1x128xf32>
    %56 = vector.broadcast %55 : vector<1x128xf32> to vector<128x128xf32>
    %57 = arith.addf %54, %56 : vector<128x128xf32>
    %cst_26 = arith.constant 0.000000e+00 : f32
    %58 = vector.broadcast %cst_26 : f32 to vector<128x128xf32>
    %59 = arith.maximumf %57, %58 : vector<128x128xf32>
    %c0_27 = arith.constant 0 : index
    %c0_28 = arith.constant 0 : index
    %60 = vector.load %arg4[%c0_27, %c0_28] : memref<128x128xf32, #tpu.memory_space<vmem>>, vector<128x128xf32>
    %61 = arith.mulf %59, %60 : vector<128x128xf32>
    %c0_29 = arith.constant 0 : index
    %c0_30 = arith.constant 0 : index
    %62 = vector.load %arg9[%c0_29, %c0_30] : memref<128x128xf32, #tpu.memory_space<vmem>>, vector<128x128xf32>
    %cst_31 = arith.constant dense<0.000000e+00> : vector<128x128xf32>
    %63 = tpu.matmul %61, %62, %cst_31 {dimension_numbers = #tpu.dot_dimension_numbers<[1], [0], [0], [1], [0, 0, 1, 1], [], []>} : vector<128x128xf32>, vector<128x128xf32>, vector<128x128xf32> -> vector<128x128xf32>
    %cst_32 = arith.constant dense<0.000000e+00> : vector<128x128xf32>
    %64 = tpu.matmul %40, %63, %cst_32 {dimension_numbers = #tpu.dot_dimension_numbers<[1], [0], [0], [1], [0, 0, 1, 1], [], []>} : vector<128x128xf32>, vector<128x128xf32>, vector<128x128xf32> -> vector<128x128xf32>
    %c0_33 = arith.constant 0 : index
    %c0_34 = arith.constant 0 : index
    %65 = vector.load %arg10[%c0_33, %c0_34] : memref<1x128xf32, #tpu.memory_space<vmem>>, vector<1x128xf32>
    %66 = vector.broadcast %65 : vector<1x128xf32> to vector<128x128xf32>
    %67 = arith.addf %64, %66 : vector<128x128xf32>
    %c0_35 = arith.constant 0 : index
    %c0_36 = arith.constant 0 : index
    %68 = vector.load %arg11[%c0_35, %c0_36] : memref<128x128xf32, #tpu.memory_space<vmem>>, vector<128x128xf32>
    tpu.vector_store %arg11[%c0_35, %c0_36], %67 {strides = array<i32>} : memref<128x128xf32, #tpu.memory_space<vmem>>, vector<128x128xf32>,
    return
  }
}

</mosaic_0001>

<llo_original>
// kernel: tpu_custom_call.1
$region0: #{tpu_custom_call.1}
  #allocation0 [shape = 'u32[]', space=smem, size = 0x4, offset = 0x4, fixed_abs, tag = 'smem constant byte address 0x4 - core index']
  #allocation1 [shape = 'u32[144,128]{1,0:T(1,128)}', space=vmem, size = 0x12000, scoped, tag = 'internal scratch']
  %s0 = inlined_call_operand.vmem [shape: s32[1,256], index: 0, kind: input, shape index: {}]
  %s1 = inlined_call_operand.vmem [shape: s32[256,1], index: 1, kind: input, shape index: {}]
  %s2 = inlined_call_operand.vmem [shape: f32[128,256], index: 2, kind: input, shape index: {}]
  %s3 = inlined_call_operand.hbm [shape: f32[128,128], index: 3, kind: input, shape index: {}]
  %s4 = inlined_call_operand.hbm [shape: f32[128,128], index: 4, kind: input, shape index: {}]
  %s5 = inlined_call_operand.hbm [shape: f32[256,128], index: 5, kind: input, shape index: {}]
  %s6 = inlined_call_operand.vmem [shape: f32[1,128], index: 6, kind: input, shape index: {}]
  %s7 = inlined_call_operand.hbm [shape: f32[128,128], index: 7, kind: input, shape index: {}]
  %s8 = inlined_call_operand.vmem [shape: f32[1,128], index: 8, kind: input, shape index: {}]
  %s9 = inlined_call_operand.hbm [shape: f32[128,128], index: 9, kind: input, shape index: {}]
  %s10 = inlined_call_operand.vmem [shape: f32[1,128], index: 10, kind: input, shape index: {}]
  %s11 = inlined_call_operand.hbm [shape: f32[128,128], index: 11, kind: output, shape index: {}]
  %s12 = sld [smem:[#allocation0]]
  $region74: #{tpu_custom_call.1} parent=0
    _
  %s14 = ssub.s32 1, %s12
  %s15 = scalar_select 0, %s14, %s12
  $region1: #{tpu_custom_call.1} parent=0
    #allocation2 [shape = 'u8[65536]{0}', space=vmem, size = 0x10000, scoped, tag = 'input window, operand 3, single buffered']
    #allocation3 [shape = 's32[1]{0}', space=sflag, size = 0x4, scoped, tag = 'scoped memory for tpu_custom_call.1']
    #allocation4 [shape = 's32[1]{0}', space=sflag, size = 0x4, scoped, tag = 'scoped memory for tpu_custom_call.1']
    #allocation5 [shape = 'u8[65536]{0}', space=vmem, size = 0x10000, scoped, tag = 'input window, operand 4, single buffered']
    #allocation6 [shape = 's32[1]{0}', space=sflag, size = 0x4, scoped, tag = 'scoped memory for tpu_custom_call.1']
    #allocation7 [shape = 'u8[131072]{0}', space=vmem, size = 0x20000, scoped, tag = 'input window, operand 5, single buffered']
    #allocation8 [shape = 'u8[65536]{0}', space=vmem, size = 0x10000, scoped, tag = 'input window, operand 7, single buffered']
    #allocation9 [shape = 's32[1]{0}', space=sflag, size = 0x4, scoped, tag = 'scoped memory for tpu_custom_call.1']
    #allocation10 [shape = 'u8[65536]{0}', space=vmem, size = 0x10000, scoped, tag = 'input window, operand 9, single buffered']
    #allocation11 [shape = 'u8[65536]{0}', space=vmem, size = 0x10000, scoped, tag = 'output window, operand 0, single buffered']
    %16 = vsyncpa [#allocation3], 0
    %17 = vsyncpa [#allocation6], 0
    %18 = vsyncpa [#allocation9], 0
    %19 = vsyncpa [#allocation4], 0
    // Predicated region
    $region2: #{tpu_custom_call.1} parent=1 // pred_check
      _
    $region3: #{tpu_custom_call.1} parent=1 // pred_check_branch
      %21 = sbr.rel (0) target = $region5
    $region4: #{tpu_custom_call.1} parent=1 // pred_region
      _
    $region5: #{tpu_custom_call.1} parent=1 // pred_fallthru
      _
    // Predicated region
    $region6: #{tpu_custom_call.1} parent=1 // pred_check
      _
    $region7: #{tpu_custom_call.1} parent=1 // pred_check_branch
      %23 = sbr.rel (0) target = $region9
    $region8: #{tpu_custom_call.1} parent=1 // pred_region
      _
    $region9: #{tpu_custom_call.1} parent=1 // pred_fallthru
      _
    // Predicated region
    $region10: #{tpu_custom_call.1} parent=1 // pred_check
      _
    $region11: #{tpu_custom_call.1} parent=1 // pred_check_branch
      %25 = sbr.rel (0) target = $region13
    $region12: #{tpu_custom_call.1} parent=1 // pred_region
      _
    $region13: #{tpu_custom_call.1} parent=1 // pred_fallthru
      _
    // Predicated region
    $region14: #{tpu_custom_call.1} parent=1 // pred_check
      _
    $region15: #{tpu_custom_call.1} parent=1 // pred_check_branch
      %27 = sbr.rel (0) target = $region17
    $region16: #{tpu_custom_call.1} parent=1 // pred_region
      %s29 = ssub.s32 2048, 2048
      %30 = vsyncadd [#allocation3], %s29
      %s31 = sshll.u32 [#allocation2], 4
      %s32 = int_to_ptr.vmem [resolvable:$true] %s31
      %37 = dma.hbm_to_vmem [thread:$0]  %s3, 2048, %s32, [#allocation3], 128, 128, 8
    $region17: #{tpu_custom_call.1} parent=1 // pred_fallthru
      _
    // Predicated region
    $region18: #{tpu_custom_call.1} parent=1 // pred_check
      _
    $region19: #{tpu_custom_call.1} parent=1 // pred_check_branch
      %39 = sbr.rel (0) target = $region21
    $region20: #{tpu_custom_call.1} parent=1 // pred_region
      %s41 = ssub.s32 2048, 2048
      %42 = vsyncadd [#allocation6], %s41
      %s43 = sshll.u32 [#allocation5], 4
      %s44 = int_to_ptr.vmem [resolvable:$true] %s43
      %49 = dma.hbm_to_vmem [thread:$0]  %s4, 2048, %s44, [#allocation6], 128, 128, 8
    $region21: #{tpu_custom_call.1} parent=1 // pred_fallthru
      _
    // Predicated region
    $region22: #{tpu_custom_call.1} parent=1 // pred_check
      _
    $region23: #{tpu_custom_call.1} parent=1 // pred_check_branch
      %51 = sbr.rel (0) target = $region25
    $region24: #{tpu_custom_call.1} parent=1 // pred_region
      %s53 = ssub.s32 4096, 4096
      %54 = vsyncadd [#allocation6], %s53
      %s55 = sshll.u32 [#allocation7], 4
      %s56 = int_to_ptr.vmem [resolvable:$true] %s55
      %61 = dma.hbm_to_vmem [thread:$0]  %s5, 4096, %s56, [#allocation6], 128, 128, 8
    $region25: #{tpu_custom_call.1} parent=1 // pred_fallthru
      _
    // Predicated region
    $region26: #{tpu_custom_call.1} parent=1 // pred_check
      _
    $region27: #{tpu_custom_call.1} parent=1 // pred_check_branch
      %63 = sbr.rel (0) target = $region29
    $region28: #{tpu_custom_call.1} parent=1 // pred_region
      _
    $region29: #{tpu_custom_call.1} parent=1 // pred_fallthru
      _
    // Predicated region
    $region30: #{tpu_custom_call.1} parent=1 // pred_check
      _
    $region31: #{tpu_custom_call.1} parent=1 // pred_check_branch
      %65 = sbr.rel (0) target = $region33
    $region32: #{tpu_custom_call.1} parent=1 // pred_region
      %s67 = ssub.s32 2048, 2048
      %68 = vsyncadd [#allocation9], %s67
      %s69 = sshll.u32 [#allocation8], 4
      %s70 = int_to_ptr.vmem [resolvable:$true] %s69
      %75 = dma.hbm_to_vmem [thread:$0]  %s7, 2048, %s70, [#allocation9], 128, 128, 8
    $region33: #{tpu_custom_call.1} parent=1 // pred_fallthru
      _
    // Predicated region
    $region34: #{tpu_custom_call.1} parent=1 // pred_check
      _
    $region35: #{tpu_custom_call.1} parent=1 // pred_check_branch
      %77 = sbr.rel (0) target = $region37
    $region36: #{tpu_custom_call.1} parent=1 // pred_region
      _
    $region37: #{tpu_custom_call.1} parent=1 // pred_fallthru
      _
    // Predicated region
    $region38: #{tpu_custom_call.1} parent=1 // pred_check
      _
    $region39: #{tpu_custom_call.1} parent=1 // pred_check_branch
      %79 = sbr.rel (0) target = $region41
    $region40: #{tpu_custom_call.1} parent=1 // pred_region
      %s81 = ssub.s32 2048, 2048
      %82 = vsyncadd [#allocation9], %s81
      %s83 = sshll.u32 [#allocation10], 4
      %s84 = int_to_ptr.vmem [resolvable:$true] %s83
      %89 = dma.hbm_to_vmem [thread:$0]  %s9, 2048, %s84, [#allocation9], 128, 128, 8
    $region41: #{tpu_custom_call.1} parent=1 // pred_fallthru
      _
    // Predicated region
    $region42: #{tpu_custom_call.1} parent=1 // pred_check
      _
    $region43: #{tpu_custom_call.1} parent=1 // pred_check_branch
      %91 = sbr.rel (0) target = $region45
    $region44: #{tpu_custom_call.1} parent=1 // pred_region
      _
    $region45: #{tpu_custom_call.1} parent=1 // pred_fallthru
      _
    // Predicated region
    $region46: #{tpu_custom_call.1} parent=1 // pred_check
      _
    $region47: #{tpu_custom_call.1} parent=1 // pred_check_branch
      %93 = sbr.rel (0) target = $region49
    $region48: #{tpu_custom_call.1} parent=1 // pred_region
      %94 = dma.done [#allocation3], 2048
    $region49: #{tpu_custom_call.1} parent=1 // pred_fallthru
      _
    // Predicated region
    $region50: #{tpu_custom_call.1} parent=1 // pred_check
      _
    $region51: #{tpu_custom_call.1} parent=1 // pred_check_branch
      %96 = sbr.rel (0) target = $region53
    $region52: #{tpu_custom_call.1} parent=1 // pred_region
      %97 = dma.done [#allocation6], 2048
    $region53: #{tpu_custom_call.1} parent=1 // pred_fallthru
      _
    // Predicated region
    $region54: #{tpu_custom_call.1} parent=1 // pred_check
      _
    $region55: #{tpu_custom_call.1} parent=1 // pred_check_branch
      %99 = sbr.rel (0) target = $region57
    $region56: #{tpu_custom_call.1} parent=1 // pred_region
      %100 = dma.done [#allocation6], 4096
    $region57: #{tpu_custom_call.1} parent=1 // pred_fallthru
      _
    // Predicated region
    $region58: #{tpu_custom_call.1} parent=1 // pred_check
      _
    $region59: #{tpu_custom_call.1} parent=1 // pred_check_branch
      %102 = sbr.rel (0) target = $region61
    $region60: #{tpu_custom_call.1} parent=1 // pred_region
      %103 = dma.done [#allocation9], 2048
    $region61: #{tpu_custom_call.1} parent=1 // pred_fallthru
      _
    // Predicated region
    $region62: #{tpu_custom_call.1} parent=1 // pred_check
      _
    $region63: #{tpu_custom_call.1} parent=1 // pred_check_branch
      %105 = sbr.rel (0) target = $region65
    $region64: #{tpu_custom_call.1} parent=1 // pred_region
      %106 = dma.done [#allocation9], 2048
    $region65: #{tpu_custom_call.1} parent=1 // pred_fallthru
      _
    %v108 = vlaneseq
    %v109 = vshrl.u32 %v108, 7
    %v110 = vadd.s32 %v109, 8
    %v111 = vadd.s32 %v109, 16
    %v112 = vadd.s32 %v109, 24
    %v113 = vadd.s32 %v109, 32
    %v114 = vadd.s32 %v109, 40
    %v115 = vadd.s32 %v109, 48
    %v116 = vadd.s32 %v109, 56
    %v117 = vadd.s32 %v109, 64
    %v118 = vadd.s32 %v109, 72
    %v119 = vadd.s32 %v109, 80
    %v120 = vadd.s32 %v109, 88
    %v121 = vadd.s32 %v109, 96
    %v122 = vadd.s32 %v109, 104
    %v123 = vadd.s32 %v109, 112
    %v124 = vadd.s32 %v109, 120
    %v125 = vld [vmem:[%s0] sm:$0x3]
    %v126 = vlaneseq
    %v127 = vshrl.u32 %v126, 7
    %v128 = vsub.s32 0, %v127
    %v129 = vrot.slane %v125, %v128
    %v130 = vlaneseq
    %v131 = vshrl.u32 %v130, 7
    %v132 = vsub.s32 1, %v131
    %v133 = vrot.slane %v125, %v132
    %vm134 = vcmp.eq.s32.totalorder %v109, %v129
    %vm135 = vcmp.eq.s32.totalorder %v109, %v133
    %vm136 = vcmp.eq.s32.totalorder %v110, %v129
    %vm137 = vcmp.eq.s32.totalorder %v110, %v133
    %vm138 = vcmp.eq.s32.totalorder %v111, %v129
    %vm139 = vcmp.eq.s32.totalorder %v111, %v133
    %vm140 = vcmp.eq.s32.totalorder %v112, %v129
    %vm141 = vcmp.eq.s32.totalorder %v112, %v133
    %vm142 = vcmp.eq.s32.totalorder %v113, %v129
    %vm143 = vcmp.eq.s32.totalorder %v113, %v133
    %vm144 = vcmp.eq.s32.totalorder %v114, %v129
    %vm145 = vcmp.eq.s32.totalorder %v114, %v133
    %vm146 = vcmp.eq.s32.totalorder %v115, %v129
    %vm147 = vcmp.eq.s32.totalorder %v115, %v133
    %vm148 = vcmp.eq.s32.totalorder %v116, %v129
    %vm149 = vcmp.eq.s32.totalorder %v116, %v133
    %vm150 = vcmp.eq.s32.totalorder %v117, %v129
    %vm151 = vcmp.eq.s32.totalorder %v117, %v133
    %vm152 = vcmp.eq.s32.totalorder %v118, %v129
    %vm153 = vcmp.eq.s32.totalorder %v118, %v133
    %vm154 = vcmp.eq.s32.totalorder %v119, %v129
    %vm155 = vcmp.eq.s32.totalorder %v119, %v133
    %vm156 = vcmp.eq.s32.totalorder %v120, %v129
    %vm157 = vcmp.eq.s32.totalorder %v120, %v133
    %vm158 = vcmp.eq.s32.totalorder %v121, %v129
    %vm159 = vcmp.eq.s32.totalorder %v121, %v133
    %vm160 = vcmp.eq.s32.totalorder %v122, %v129
    %vm161 = vcmp.eq.s32.totalorder %v122, %v133
    %vm162 = vcmp.eq.s32.totalorder %v123, %v129
    %vm163 = vcmp.eq.s32.totalorder %v123, %v133
    %vm164 = vcmp.eq.s32.totalorder %v124, %v129
    %vm165 = vcmp.eq.s32.totalorder %v124, %v133
    %v166 = vsel %vm134, 1, 0
    %v167 = vsel %vm135, 1, 0
    %v168 = vsel %vm136, 1, 0
    %v169 = vsel %vm137, 1, 0
    %v170 = vsel %vm138, 1, 0
    %v171 = vsel %vm139, 1, 0
    %v172 = vsel %vm140, 1, 0
    %v173 = vsel %vm141, 1, 0
    %v174 = vsel %vm142, 1, 0
    %v175 = vsel %vm143, 1, 0
    %v176 = vsel %vm144, 1, 0
    %v177 = vsel %vm145, 1, 0
    %v178 = vsel %vm146, 1, 0
    %v179 = vsel %vm147, 1, 0
    %v180 = vsel %vm148, 1, 0
    %v181 = vsel %vm149, 1, 0
    %v182 = vsel %vm150, 1, 0
    %v183 = vsel %vm151, 1, 0
    %v184 = vsel %vm152, 1, 0
    %v185 = vsel %vm153, 1, 0
    %v186 = vsel %vm154, 1, 0
    %v187 = vsel %vm155, 1, 0
    %v188 = vsel %vm156, 1, 0
    %v189 = vsel %vm157, 1, 0
    %v190 = vsel %vm158, 1, 0
    %v191 = vsel %vm159, 1, 0
    %v192 = vsel %vm160, 1, 0
    %v193 = vsel %vm161, 1, 0
    %v194 = vsel %vm162, 1, 0
    %v195 = vsel %vm163, 1, 0
    %v196 = vsel %vm164, 1, 0
    %v197 = vsel %vm165, 1, 0
    %v198 = vcvt.s32.f32 %v166
    %v199 = vcvt.s32.f32 %v167
    %v200 = vcvt.s32.f32 %v168
    %v201 = vcvt.s32.f32 %v169
    %v202 = vcvt.s32.f32 %v170
    %v203 = vcvt.s32.f32 %v171
    %v204 = vcvt.s32.f32 %v172
    %v205 = vcvt.s32.f32 %v173
    %v206 = vcvt.s32.f32 %v174
    %v207 = vcvt.s32.f32 %v175
    %v208 = vcvt.s32.f32 %v176
    %v209 = vcvt.s32.f32 %v177
    %v210 = vcvt.s32.f32 %v178
    %v211 = vcvt.s32.f32 %v179
    %v212 = vcvt.s32.f32 %v180
    %v213 = vcvt.s32.f32 %v181
    %v214 = vcvt.s32.f32 %v182
    %v215 = vcvt.s32.f32 %v183
    %v216 = vcvt.s32.f32 %v184
    %v217 = vcvt.s32.f32 %v185
    %v218 = vcvt.s32.f32 %v186
    %v219 = vcvt.s32.f32 %v187
    %v220 = vcvt.s32.f32 %v188
    %v221 = vcvt.s32.f32 %v189
    %v222 = vcvt.s32.f32 %v190
    %v223 = vcvt.s32.f32 %v191
    %v224 = vcvt.s32.f32 %v192
    %v225 = vcvt.s32.f32 %v193
    %v226 = vcvt.s32.f32 %v194
    %v227 = vcvt.s32.f32 %v195
    %v228 = vcvt.s32.f32 %v196
    %v229 = vcvt.s32.f32 %v197
    %v230 = vpack.c.bf16 %v200, %v198
    %v231 = vpack.c.bf16 %v201, %v199
    %v232 = vpack.c.bf16 %v204, %v202
    %v233 = vpack.c.bf16 %v205, %v203
    %v234 = vpack.c.bf16 %v208, %v206
    %v235 = vpack.c.bf16 %v209, %v207
    %v236 = vpack.c.bf16 %v212, %v210
    %v237 = vpack.c.bf16 %v213, %v211
    %v238 = vpack.c.bf16 %v216, %v214
    %v239 = vpack.c.bf16 %v217, %v215
    %v240 = vpack.c.bf16 %v220, %v218
    %v241 = vpack.c.bf16 %v221, %v219
    %v242 = vpack.c.bf16 %v224, %v222
    %v243 = vpack.c.bf16 %v225, %v223
    %v244 = vpack.c.bf16 %v228, %v226
    %v245 = vpack.c.bf16 %v229, %v227
    %v246 = vlaneseq
    %v247 = vand.u32 %v246, 127
    %v248 = vld [vmem:[%s1] sm:$0xff]
    %v249 = vld [vmem:[%s1 + $0x8] sm:$0xff]
    %v250 = vld [vmem:[%s1 + $0x10] sm:$0xff]
    %v251 = vld [vmem:[%s1 + $0x18] sm:$0xff]
    %v252 = vld [vmem:[%s1 + $0x20] sm:$0xff]
    %v253 = vld [vmem:[%s1 + $0x28] sm:$0xff]
    %v254 = vld [vmem:[%s1 + $0x30] sm:$0xff]
    %v255 = vld [vmem:[%s1 + $0x38] sm:$0xff]
    %v256 = vld [vmem:[%s1 + $0x40] sm:$0xff]
    %v257 = vld [vmem:[%s1 + $0x48] sm:$0xff]
    %v258 = vld [vmem:[%s1 + $0x50] sm:$0xff]
    %v259 = vld [vmem:[%s1 + $0x58] sm:$0xff]
    %v260 = vld [vmem:[%s1 + $0x60] sm:$0xff]
    %v261 = vld [vmem:[%s1 + $0x68] sm:$0xff]
    %v262 = vld [vmem:[%s1 + $0x70] sm:$0xff]
    %v263 = vld [vmem:[%s1 + $0x78] sm:$0xff]
    %v264 = vld [vmem:[%s1 + $0x80] sm:$0xff]
    %v265 = vld [vmem:[%s1 + $0x88] sm:$0xff]
    %v266 = vld [vmem:[%s1 + $0x90] sm:$0xff]
    %v267 = vld [vmem:[%s1 + $0x98] sm:$0xff]
    %v268 = vld [vmem:[%s1 + $0xa0] sm:$0xff]
    %v269 = vld [vmem:[%s1 + $0xa8] sm:$0xff]
    %v270 = vld [vmem:[%s1 + $0xb0] sm:$0xff]
    %v271 = vld [vmem:[%s1 + $0xb8] sm:$0xff]
    %v272 = vld [vmem:[%s1 + $0xc0] sm:$0xff]
    %v273 = vld [vmem:[%s1 + $0xc8] sm:$0xff]
    %v274 = vld [vmem:[%s1 + $0xd0] sm:$0xff]
    %v275 = vld [vmem:[%s1 + $0xd8] sm:$0xff]
    %v276 = vld [vmem:[%s1 + $0xe0] sm:$0xff]
    %v277 = vld [vmem:[%s1 + $0xe8] sm:$0xff]
    %v278 = vld [vmem:[%s1 + $0xf0] sm:$0xff]
    %v279 = vld [vmem:[%s1 + $0xf8] sm:$0xff]
    %280 = vset.pattern.permute.xlu0 0
    %281 = vperm.xlu0 %280, %v248
    %v282 = vpop.permute.xlu0 %281
    %283 = vset.pattern.permute.xlu0 0
    %284 = vperm.xlu0 %283, %v249
    %v285 = vpop.permute.xlu0 %284
    %286 = vset.pattern.permute.xlu0 0
    %287 = vperm.xlu0 %286, %v250
    %v288 = vpop.permute.xlu0 %287
    %289 = vset.pattern.permute.xlu0 0
    %290 = vperm.xlu0 %289, %v251
    %v291 = vpop.permute.xlu0 %290
    %292 = vset.pattern.permute.xlu0 0
    %293 = vperm.xlu0 %292, %v252
    %v294 = vpop.permute.xlu0 %293
    %295 = vset.pattern.permute.xlu0 0
    %296 = vperm.xlu0 %295, %v253
    %v297 = vpop.permute.xlu0 %296
    %298 = vset.pattern.permute.xlu0 0
    %299 = vperm.xlu0 %298, %v254
    %v300 = vpop.permute.xlu0 %299
    %301 = vset.pattern.permute.xlu0 0
    %302 = vperm.xlu0 %301, %v255
    %v303 = vpop.permute.xlu0 %302
    %304 = vset.pattern.permute.xlu0 0
    %305 = vperm.xlu0 %304, %v256
    %v306 = vpop.permute.xlu0 %305
    %307 = vset.pattern.permute.xlu0 0
    %308 = vperm.xlu0 %307, %v257
    %v309 = vpop.permute.xlu0 %308
    %310 = vset.pattern.permute.xlu0 0
    %311 = vperm.xlu0 %310, %v258
    %v312 = vpop.permute.xlu0 %311
    %313 = vset.pattern.permute.xlu0 0
    %314 = vperm.xlu0 %313, %v259
    %v315 = vpop.permute.xlu0 %314
    %316 = vset.pattern.permute.xlu0 0
    %317 = vperm.xlu0 %316, %v260
    %v318 = vpop.permute.xlu0 %317
    %319 = vset.pattern.permute.xlu0 0
    %320 = vperm.xlu0 %319, %v261
    %v321 = vpop.permute.xlu0 %320
    %322 = vset.pattern.permute.xlu0 0
    %323 = vperm.xlu0 %322, %v262
    %v324 = vpop.permute.xlu0 %323
    %325 = vset.pattern.permute.xlu0 0
    %326 = vperm.xlu0 %325, %v263
    %v327 = vpop.permute.xlu0 %326
    %328 = vset.pattern.permute.xlu0 0
    %329 = vperm.xlu0 %328, %v264
    %v330 = vpop.permute.xlu0 %329
    %331 = vset.pattern.permute.xlu0 0
    %332 = vperm.xlu0 %331, %v265
    %v333 = vpop.permute.xlu0 %332
    %334 = vset.pattern.permute.xlu0 0
    %335 = vperm.xlu0 %334, %v266
    %v336 = vpop.permute.xlu0 %335
    %337 = vset.pattern.permute.xlu0 0
    %338 = vperm.xlu0 %337, %v267
    %v339 = vpop.permute.xlu0 %338
    %340 = vset.pattern.permute.xlu0 0
    %341 = vperm.xlu0 %340, %v268
    %v342 = vpop.permute.xlu0 %341
    %343 = vset.pattern.permute.xlu0 0
    %344 = vperm.xlu0 %343, %v269
    %v345 = vpop.permute.xlu0 %344
    %346 = vset.pattern.permute.xlu0 0
    %347 = vperm.xlu0 %346, %v270
    %v348 = vpop.permute.xlu0 %347
    %349 = vset.pattern.permute.xlu0 0
    %350 = vperm.xlu0 %349, %v271
    %v351 = vpop.permute.xlu0 %350
    %352 = vset.pattern.permute.xlu0 0
    %353 = vperm.xlu0 %352, %v272
    %v354 = vpop.permute.xlu0 %353
    %355 = vset.pattern.permute.xlu0 0
    %356 = vperm.xlu0 %355, %v273
    %v357 = vpop.permute.xlu0 %356
    %358 = vset.pattern.permute.xlu0 0
    %359 = vperm.xlu0 %358, %v274
    %v360 = vpop.permute.xlu0 %359
    %361 = vset.pattern.permute.xlu0 0
    %362 = vperm.xlu0 %361, %v275
    %v363 = vpop.permute.xlu0 %362
    %364 = vset.pattern.permute.xlu0 0
    %365 = vperm.xlu0 %364, %v276
    %v366 = vpop.permute.xlu0 %365
    %367 = vset.pattern.permute.xlu0 0
    %368 = vperm.xlu0 %367, %v277
    %v369 = vpop.permute.xlu0 %368
    %370 = vset.pattern.permute.xlu0 0
    %371 = vperm.xlu0 %370, %v278
    %v372 = vpop.permute.xlu0 %371
    %373 = vset.pattern.permute.xlu0 0
    %374 = vperm.xlu0 %373, %v279
    %v375 = vpop.permute.xlu0 %374
    %vm376 = vcmp.eq.s32.totalorder %v247, %v282
    %vm377 = vcmp.eq.s32.totalorder %v247, %v285
    %vm378 = vcmp.eq.s32.totalorder %v247, %v288
    %vm379 = vcmp.eq.s32.totalorder %v247, %v291
    %vm380 = vcmp.eq.s32.totalorder %v247, %v294
    %vm381 = vcmp.eq.s32.totalorder %v247, %v297
    %vm382 = vcmp.eq.s32.totalorder %v247, %v300
    %vm383 = vcmp.eq.s32.totalorder %v247, %v303
    %vm384 = vcmp.eq.s32.totalorder %v247, %v306
    %vm385 = vcmp.eq.s32.totalorder %v247, %v309
    %vm386 = vcmp.eq.s32.totalorder %v247, %v312
    %vm387 = vcmp.eq.s32.totalorder %v247, %v315
    %vm388 = vcmp.eq.s32.totalorder %v247, %v318
    %vm389 = vcmp.eq.s32.totalorder %v247, %v321
    %vm390 = vcmp.eq.s32.totalorder %v247, %v324
    %vm391 = vcmp.eq.s32.totalorder %v247, %v327
    %vm392 = vcmp.eq.s32.totalorder %v247, %v330
    %vm393 = vcmp.eq.s32.totalorder %v247, %v333
    %vm394 = vcmp.eq.s32.totalorder %v247, %v336
    %vm395 = vcmp.eq.s32.totalorder %v247, %v339
    %vm396 = vcmp.eq.s32.totalorder %v247, %v342
    %vm397 = vcmp.eq.s32.totalorder %v247, %v345
    %vm398 = vcmp.eq.s32.totalorder %v247, %v348
    %vm399 = vcmp.eq.s32.totalorder %v247, %v351
    %vm400 = vcmp.eq.s32.totalorder %v247, %v354
    %vm401 = vcmp.eq.s32.totalorder %v247, %v357
    %vm402 = vcmp.eq.s32.totalorder %v247, %v360
    %vm403 = vcmp.eq.s32.totalorder %v247, %v363
    %vm404 = vcmp.eq.s32.totalorder %v247, %v366
    %vm405 = vcmp.eq.s32.totalorder %v247, %v369
    %vm406 = vcmp.eq.s32.totalorder %v247, %v372
    %vm407 = vcmp.eq.s32.totalorder %v247, %v375
    %v408 = vsel %vm376, 1, 0
    %v409 = vsel %vm377, 1, 0
    %v410 = vsel %vm378, 1, 0
    %v411 = vsel %vm379, 1, 0
    %v412 = vsel %vm380, 1, 0
    %v413 = vsel %vm381, 1, 0
    %v414 = vsel %vm382, 1, 0
    %v415 = vsel %vm383, 1, 0
    %v416 = vsel %vm384, 1, 0
    %v417 = vsel %vm385, 1, 0
    %v418 = vsel %vm386, 1, 0
    %v419 = vsel %vm387, 1, 0
    %v420 = vsel %vm388, 1, 0
    %v421 = vsel %vm389, 1, 0
    %v422 = vsel %vm390, 1, 0
    %v423 = vsel %vm391, 1, 0
    %v424 = vsel %vm392, 1, 0
    %v425 = vsel %vm393, 1, 0
    %v426 = vsel %vm394, 1, 0
    %v427 = vsel %vm395, 1, 0
    %v428 = vsel %vm396, 1, 0
    %v429 = vsel %vm397, 1, 0
    %v430 = vsel %vm398, 1, 0
    %v431 = vsel %vm399, 1, 0
    %v432 = vsel %vm400, 1, 0
    %v433 = vsel %vm401, 1, 0
    %v434 = vsel %vm402, 1, 0
    %v435 = vsel %vm403, 1, 0
    %v436 = vsel %vm404, 1, 0
    %v437 = vsel %vm405, 1, 0
    %v438 = vsel %vm406, 1, 0
    %v439 = vsel %vm407, 1, 0
    %v440 = vcvt.s32.f32 %v408
    %v441 = vcvt.s32.f32 %v409
    %v442 = vcvt.s32.f32 %v410
    %v443 = vcvt.s32.f32 %v411
    %v444 = vcvt.s32.f32 %v412
    %v445 = vcvt.s32.f32 %v413
    %v446 = vcvt.s32.f32 %v414
    %v447 = vcvt.s32.f32 %v415
    %v448 = vcvt.s32.f32 %v416
    %v449 = vcvt.s32.f32 %v417
    %v450 = vcvt.s32.f32 %v418
    %v451 = vcvt.s32.f32 %v419
    %v452 = vcvt.s32.f32 %v420
    %v453 = vcvt.s32.f32 %v421
    %v454 = vcvt.s32.f32 %v422
    %v455 = vcvt.s32.f32 %v423
    %v456 = vcvt.s32.f32 %v424
    %v457 = vcvt.s32.f32 %v425
    %v458 = vcvt.s32.f32 %v426
    %v459 = vcvt.s32.f32 %v427
    %v460 = vcvt.s32.f32 %v428
    %v461 = vcvt.s32.f32 %v429
    %v462 = vcvt.s32.f32 %v430
    %v463 = vcvt.s32.f32 %v431
    %v464 = vcvt.s32.f32 %v432
    %v465 = vcvt.s32.f32 %v433
    %v466 = vcvt.s32.f32 %v434
    %v467 = vcvt.s32.f32 %v435
    %v468 = vcvt.s32.f32 %v436
    %v469 = vcvt.s32.f32 %v437
    %v470 = vcvt.s32.f32 %v438
    %v471 = vcvt.s32.f32 %v439
    %v472 = vpack.c.bf16 %v441, %v440
    %v473 = vpack.c.bf16 %v443, %v442
    %v474 = vpack.c.bf16 %v445, %v444
    %v475 = vpack.c.bf16 %v447, %v446
    %v476 = vpack.c.bf16 %v449, %v448
    %v477 = vpack.c.bf16 %v451, %v450
    %v478 = vpack.c.bf16 %v453, %v452
    %v479 = vpack.c.bf16 %v455, %v454
    %v480 = vpack.c.bf16 %v457, %v456
    %v481 = vpack.c.bf16 %v459, %v458
    %v482 = vpack.c.bf16 %v461, %v460
    %v483 = vpack.c.bf16 %v463, %v462
    %v484 = vpack.c.bf16 %v465, %v464
    %v485 = vpack.c.bf16 %v467, %v466
    %v486 = vpack.c.bf16 %v469, %v468
    %v487 = vpack.c.bf16 %v471, %v470
    %488 = vmatprep.subr.bf16.mxu0 0
    %489 = vmatpush1.bf16.msra.mxu0 %v472
    %490 = vmatprep.subr.bf16.mxu0 0
    %491 = vmatpush1.bf16.msra.mxu0 %v473
    %492 = vmatprep.subr.bf16.mxu0 0
    %493 = vmatpush1.bf16.msra.mxu0 %v474
    %494 = vmatprep.subr.bf16.mxu0 0
    %495 = vmatpush1.bf16.msra.mxu0 %v475
    %496 = vmatprep.subr.bf16.mxu0 0
    %497 = vmatpush1.bf16.msra.mxu0 %v476
    %498 = vmatprep.subr.bf16.mxu0 0
    %499 = vmatpush1.bf16.msra.mxu0 %v477
    %500 = vmatprep.subr.bf16.mxu0 0
    %501 = vmatpush1.bf16.msra.mxu0 %v478
    %502 = vmatprep.subr.bf16.mxu0 0
    %503 = vmatpush1.bf16.msra.mxu0 %v479
    %504 = vmatprep.subr.bf16.mxu0 0
    %505 = vmatpush1.bf16.msra.mxu0 %v480
    %506 = vmatprep.subr.bf16.mxu0 0
    %507 = vmatpush1.bf16.msra.mxu0 %v481
    %508 = vmatprep.subr.bf16.mxu0 0
    %509 = vmatpush1.bf16.msra.mxu0 %v482
    %510 = vmatprep.subr.bf16.mxu0 0
    %511 = vmatpush1.bf16.msra.mxu0 %v483
    %512 = vmatprep.subr.bf16.mxu0 0
    %513 = vmatpush1.bf16.msra.mxu0 %v484
    %514 = vmatprep.subr.bf16.mxu0 0
    %515 = vmatpush1.bf16.msra.mxu0 %v485
    %516 = vmatprep.subr.bf16.mxu0 0
    %517 = vmatpush1.bf16.msra.mxu0 %v486
    %518 = vmatprep.subr.bf16.mxu0 0
    %519 = vmatpush1.bf16.msra.mxu0 %v487
    %520 = vmatprep.mubr.bf16.mxu0 %v231
    %521 = vmatmul.mubr.bf16.gmra.mrb[0].mxu0 %v230
    %v522 = vpop.f32.mrb[0].mxu0
    %v523 = vadd.f32 0.0, %v522
    %v524 = vpop.f32.mrb[0].mxu0
    %v525 = vpop.f32.mrb[0].mxu0
    %v526 = vadd.f32 0.0, %v525
    %v527 = vpop.f32.mrb[0].mxu0
    %528 = vmatprep.mubr.bf16.mxu0 %v233
    %529 = vmatmul.mubr.bf16.gmra.mrb[0].mxu0 %v232
    %v530 = vpop.f32.mrb[0].mxu0
    %v531 = vadd.f32 0.0, %v530
    %v532 = vpop.f32.mrb[0].mxu0
    %v533 = vpop.f32.mrb[0].mxu0
    %v534 = vadd.f32 0.0, %v533
    %v535 = vpop.f32.mrb[0].mxu0
    %536 = vmatprep.mubr.bf16.mxu0 %v235
    %537 = vmatmul.mubr.bf16.gmra.mrb[0].mxu0 %v234
    %v538 = vpop.f32.mrb[0].mxu0
    %v539 = vadd.f32 0.0, %v538
    %v540 = vpop.f32.mrb[0].mxu0
    %v541 = vpop.f32.mrb[0].mxu0
    %v542 = vadd.f32 0.0, %v541
    %v543 = vpop.f32.mrb[0].mxu0
    %544 = vmatprep.mubr.bf16.mxu0 %v237
    %545 = vmatmul.mubr.bf16.gmra.mrb[0].mxu0 %v236
    %v546 = vpop.f32.mrb[0].mxu0
    %v547 = vadd.f32 0.0, %v546
    %v548 = vpop.f32.mrb[0].mxu0
    %v549 = vpop.f32.mrb[0].mxu0
    %v550 = vadd.f32 0.0, %v549
    %v551 = vpop.f32.mrb[0].mxu0
    %552 = vmatprep.mubr.bf16.mxu0 %v239
    %553 = vmatmul.mubr.bf16.gmra.mrb[0].mxu0 %v238
    %v554 = vpop.f32.mrb[0].mxu0
    %v555 = vadd.f32 0.0, %v554
    %v556 = vpop.f32.mrb[0].mxu0
    %v557 = vpop.f32.mrb[0].mxu0
    %v558 = vadd.f32 0.0, %v557
    %v559 = vpop.f32.mrb[0].mxu0
    %560 = vmatprep.mubr.bf16.mxu0 %v241
    %561 = vmatmul.mubr.bf16.gmra.mrb[0].mxu0 %v240
    %v562 = vpop.f32.mrb[0].mxu0
    %v563 = vadd.f32 0.0, %v562
    %v564 = vpop.f32.mrb[0].mxu0
    %v565 = vpop.f32.mrb[0].mxu0
    %v566 = vadd.f32 0.0, %v565
    %v567 = vpop.f32.mrb[0].mxu0
    %568 = vmatprep.mubr.bf16.mxu0 %v243
    %569 = vmatmul.mubr.bf16.gmra.mrb[0].mxu0 %v242
    %v570 = vpop.f32.mrb[0].mxu0
    %v571 = vadd.f32 0.0, %v570
    %v572 = vpop.f32.mrb[0].mxu0
    %v573 = vpop.f32.mrb[0].mxu0
    %v574 = vadd.f32 0.0, %v573
    %v575 = vpop.f32.mrb[0].mxu0
    %576 = vmatprep.mubr.bf16.mxu0 %v245
    %577 = vmatmul.mubr.bf16.gmra.mrb[0].mxu0 %v244
    %v578 = vpop.f32.mrb[0].mxu0
    %v579 = vadd.f32 0.0, %v578
    %v580 = vpop.f32.mrb[0].mxu0
    %v581 = vpop.f32.mrb[0].mxu0
    %v582 = vadd.f32 0.0, %v581
    %v583 = vpop.f32.mrb[0].mxu0
    %584 = vdwg.mxu0
    %vm585 = vcmp.eq.s32.totalorder %v109, %v247
    %vm586 = vcmp.eq.s32.totalorder %v110, %v247
    %vm587 = vcmp.eq.s32.totalorder %v111, %v247
    %vm588 = vcmp.eq.s32.totalorder %v112, %v247
    %vm589 = vcmp.eq.s32.totalorder %v113, %v247
    %vm590 = vcmp.eq.s32.totalorder %v114, %v247
    %vm591 = vcmp.eq.s32.totalorder %v115, %v247
    %vm592 = vcmp.eq.s32.totalorder %v116, %v247
    %vm593 = vcmp.eq.s32.totalorder %v117, %v247
    %vm594 = vcmp.eq.s32.totalorder %v118, %v247
    %vm595 = vcmp.eq.s32.totalorder %v119, %v247
    %vm596 = vcmp.eq.s32.totalorder %v120, %v247
    %vm597 = vcmp.eq.s32.totalorder %v121, %v247
    %vm598 = vcmp.eq.s32.totalorder %v122, %v247
    %vm599 = vcmp.eq.s32.totalorder %v123, %v247
    %vm600 = vcmp.eq.s32.totalorder %v124, %v247
    %v601 = vsel %vm585, 1, 0
    %v602 = vsel %vm586, 1, 0
    %v603 = vsel %vm587, 1, 0
    %v604 = vsel %vm588, 1, 0
    %v605 = vsel %vm589, 1, 0
    %v606 = vsel %vm590, 1, 0
    %v607 = vsel %vm591, 1, 0
    %v608 = vsel %vm592, 1, 0
    %v609 = vsel %vm593, 1, 0
    %v610 = vsel %vm594, 1, 0
    %v611 = vsel %vm595, 1, 0
    %v612 = vsel %vm596, 1, 0
    %v613 = vsel %vm597, 1, 0
    %v614 = vsel %vm598, 1, 0
    %v615 = vsel %vm599, 1, 0
    %v616 = vsel %vm600, 1, 0
    %v617 = vcvt.s32.f32 %v601
    %v618 = vcvt.s32.f32 %v602
    %v619 = vcvt.s32.f32 %v603
    %v620 = vcvt.s32.f32 %v604
    %v621 = vcvt.s32.f32 %v605
    %v622 = vcvt.s32.f32 %v606
    %v623 = vcvt.s32.f32 %v607
    %v624 = vcvt.s32.f32 %v608
    %v625 = vcvt.s32.f32 %v609
    %v626 = vcvt.s32.f32 %v610
    %v627 = vcvt.s32.f32 %v611
    %v628 = vcvt.s32.f32 %v612
    %v629 = vcvt.s32.f32 %v613
    %v630 = vcvt.s32.f32 %v614
    %v631 = vcvt.s32.f32 %v615
    %v632 = vcvt.s32.f32 %v616
    %v633 = vmul.f32 %v523, %v617
    %v634 = vmul.f32 %v526, %v618
    %v635 = vmul.f32 %v531, %v619
    %v636 = vmul.f32 %v534, %v620
    %v637 = vmul.f32 %v539, %v621
    %v638 = vmul.f32 %v542, %v622
    %v639 = vmul.f32 %v547, %v623
    %v640 = vmul.f32 %v550, %v624
    %v641 = vmul.f32 %v555, %v625
    %v642 = vmul.f32 %v558, %v626
    %v643 = vmul.f32 %v563, %v627
    %v644 = vmul.f32 %v566, %v628
    %v645 = vmul.f32 %v571, %v629
    %v646 = vmul.f32 %v574, %v630
    %v647 = vmul.f32 %v579, %v631
    %v648 = vmul.f32 %v582, %v632
    %649 = vadd.xlane.f32.xlu0 %v633
    %v650 = vpop.xlane.xlu0 %649
    %651 = vadd.xlane.f32.xlu0 %v634
    %v652 = vpop.xlane.xlu0 %651
    %653 = vadd.xlane.f32.xlu0 %v635
    %v654 = vpop.xlane.xlu0 %653
    %655 = vadd.xlane.f32.xlu0 %v636
    %v656 = vpop.xlane.xlu0 %655
    %657 = vadd.xlane.f32.xlu0 %v637
    %v658 = vpop.xlane.xlu0 %657
    %659 = vadd.xlane.f32.xlu0 %v638
    %v660 = vpop.xlane.xlu0 %659
    %661 = vadd.xlane.f32.xlu0 %v639
    %v662 = vpop.xlane.xlu0 %661
    %663 = vadd.xlane.f32.xlu0 %v640
    %v664 = vpop.xlane.xlu0 %663
    %665 = vadd.xlane.f32.xlu0 %v641
    %v666 = vpop.xlane.xlu0 %665
    %667 = vadd.xlane.f32.xlu0 %v642
    %v668 = vpop.xlane.xlu0 %667
    %669 = vadd.xlane.f32.xlu0 %v643
    %v670 = vpop.xlane.xlu0 %669
    %671 = vadd.xlane.f32.xlu0 %v644
    %v672 = vpop.xlane.xlu0 %671
    %673 = vadd.xlane.f32.xlu0 %v645
    %v674 = vpop.xlane.xlu0 %673
    %675 = vadd.xlane.f32.xlu0 %v646
    %v676 = vpop.xlane.xlu0 %675
    %677 = vadd.xlane.f32.xlu0 %v647
    %v678 = vpop.xlane.xlu0 %677
    %679 = vadd.xlane.f32.xlu0 %v648
    %v680 = vpop.xlane.xlu0 %679
    %vm681 = vcmp.gt.f32.partialorder %v650, 0.0
    %vm682 = vcmp.gt.f32.partialorder %v652, 0.0
    %vm683 = vcmp.gt.f32.partialorder %v654, 0.0
    %vm684 = vcmp.gt.f32.partialorder %v656, 0.0
    %vm685 = vcmp.gt.f32.partialorder %v658, 0.0
    %vm686 = vcmp.gt.f32.partialorder %v660, 0.0
    %vm687 = vcmp.gt.f32.partialorder %v662, 0.0
    %vm688 = vcmp.gt.f32.partialorder %v664, 0.0
    %vm689 = vcmp.gt.f32.partialorder %v666, 0.0
    %vm690 = vcmp.gt.f32.partialorder %v668, 0.0
    %vm691 = vcmp.gt.f32.partialorder %v670, 0.0
    %vm692 = vcmp.gt.f32.partialorder %v672, 0.0
    %vm693 = vcmp.gt.f32.partialorder %v674, 0.0
    %vm694 = vcmp.gt.f32.partialorder %v676, 0.0
    %vm695 = vcmp.gt.f32.partialorder %v678, 0.0
    %vm696 = vcmp.gt.f32.partialorder %v680, 0.0
    %v697 = vsel %vm681, 0.0, 1.0
    %v698 = vsel %vm682, 0.0, 1.0
    %v699 = vsel %vm683, 0.0, 1.0
    %v700 = vsel %vm684, 0.0, 1.0
    %v701 = vsel %vm685, 0.0, 1.0
    %v702 = vsel %vm686, 0.0, 1.0
    %v703 = vsel %vm687, 0.0, 1.0
    %v704 = vsel %vm688, 0.0, 1.0
    %v705 = vsel %vm689, 0.0, 1.0
    %v706 = vsel %vm690, 0.0, 1.0
    %v707 = vsel %vm691, 0.0, 1.0
    %v708 = vsel %vm692, 0.0, 1.0
    %v709 = vsel %vm693, 0.0, 1.0
    %v710 = vsel %vm694, 0.0, 1.0
    %v711 = vsel %vm695, 0.0, 1.0
    %v712 = vsel %vm696, 0.0, 1.0
    %v713 = vmul.f32 %v617, %v697
    %v714 = vmul.f32 %v618, %v698
    %v715 = vmul.f32 %v619, %v699
    %v716 = vmul.f32 %v620, %v700
    %v717 = vmul.f32 %v621, %v701
    %v718 = vmul.f32 %v622, %v702
    %v719 = vmul.f32 %v623, %v703
    %v720 = vmul.f32 %v624, %v704
    %v721 = vmul.f32 %v625, %v705
    %v722 = vmul.f32 %v626, %v706
    %v723 = vmul.f32 %v627, %v707
    %v724 = vmul.f32 %v628, %v708
    %v725 = vmul.f32 %v629, %v709
    %v726 = vmul.f32 %v630, %v710
    %v727 = vmul.f32 %v631, %v711
    %v728 = vmul.f32 %v632, %v712
    %v729 = vadd.f32 %v523, %v713
    %v730 = vadd.f32 %v526, %v714
    %v731 = vadd.f32 %v531, %v715
    %v732 = vadd.f32 %v534, %v716
    %v733 = vadd.f32 %v539, %v717
    %v734 = vadd.f32 %v542, %v718
    %v735 = vadd.f32 %v547, %v719
    %v736 = vadd.f32 %v550, %v720
    %v737 = vadd.f32 %v555, %v721
    %v738 = vadd.f32 %v558, %v722
    %v739 = vadd.f32 %v563, %v723
    %v740 = vadd.f32 %v566, %v724
    %v741 = vadd.f32 %v571, %v725
    %v742 = vadd.f32 %v574, %v726
    %v743 = vadd.f32 %v579, %v727
    %v744 = vadd.f32 %v582, %v728
    %745 = vadd.xlane.f32.xlu0 %v729
    %v746 = vpop.xlane.xlu0 %745
    %747 = vadd.xlane.f32.xlu0 %v730
    %v748 = vpop.xlane.xlu0 %747
    %749 = vadd.xlane.f32.xlu0 %v731
    %v750 = vpop.xlane.xlu0 %749
    %751 = vadd.xlane.f32.xlu0 %v732
    %v752 = vpop.xlane.xlu0 %751
    %753 = vadd.xlane.f32.xlu0 %v733
    %v754 = vpop.xlane.xlu0 %753
    %755 = vadd.xlane.f32.xlu0 %v734
    %v756 = vpop.xlane.xlu0 %755
    %757 = vadd.xlane.f32.xlu0 %v735
    %v758 = vpop.xlane.xlu0 %757
    %759 = vadd.xlane.f32.xlu0 %v736
    %v760 = vpop.xlane.xlu0 %759
    %761 = vadd.xlane.f32.xlu0 %v737
    %v762 = vpop.xlane.xlu0 %761
    %763 = vadd.xlane.f32.xlu0 %v738
    %v764 = vpop.xlane.xlu0 %763
    %765 = vadd.xlane.f32.xlu0 %v739
    %v766 = vpop.xlane.xlu0 %765
    %767 = vadd.xlane.f32.xlu0 %v740
    %v768 = vpop.xlane.xlu0 %767
    %769 = vadd.xlane.f32.xlu0 %v741
    %v770 = vpop.xlane.xlu0 %769
    %771 = vadd.xlane.f32.xlu0 %v742
    %v772 = vpop.xlane.xlu0 %771
    %773 = vadd.xlane.f32.xlu0 %v743
    %v774 = vpop.xlane.xlu0 %773
    %775 = vadd.xlane.f32.xlu0 %v744
    %v776 = vpop.xlane.xlu0 %775
    %v777 = vrsqrt.pop %v746
    %v778 = vrsqrt.pop %v748
    %v779 = vrsqrt.pop %v750
    %v780 = vrsqrt.pop %v752
    %v781 = vrsqrt.pop %v754
    %v782 = vrsqrt.pop %v756
    %v783 = vrsqrt.pop %v758
    %v784 = vrsqrt.pop %v760
    %v785 = vrsqrt.pop %v762
    %v786 = vrsqrt.pop %v764
    %v787 = vrsqrt.pop %v766
    %v788 = vrsqrt.pop %v768
    %v789 = vrsqrt.pop %v770
    %v790 = vrsqrt.pop %v772
    %v791 = vrsqrt.pop %v774
    %v792 = vrsqrt.pop %v776
    %v793 = vadd.f32 %v729, %v730
    %v794 = vadd.f32 %v793, %v731
    %v795 = vadd.f32 %v794, %v732
    %v796 = vadd.f32 %v795, %v733
    %v797 = vadd.f32 %v796, %v734
    %v798 = vadd.f32 %v797, %v735
    %v799 = vadd.f32 %v798, %v736
    %v800 = vadd.f32 %v799, %v737
    %v801 = vadd.f32 %v800, %v738
    %v802 = vadd.f32 %v801, %v739
    %v803 = vadd.f32 %v802, %v740
    %v804 = vadd.f32 %v803, %v741
    %v805 = vadd.f32 %v804, %v742
    %v806 = vadd.f32 %v805, %v743
    %v807 = vadd.f32 %v806, %v744
    %v808 = vrot.slane %v807, 4
    %v809 = vadd.f32 %v807, %v808
    %v810 = vrot.slane %v809, 2
    %v811 = vadd.f32 %v809, %v810
    %v812 = vrot.slane %v811, 1
    %v813 = vadd.f32 %v811, %v812
    %v814 = vrsqrt.pop %v813
    %v815 = vmul.f32 %v729, %v777
    %v816 = vmul.f32 %v730, %v778
    %v817 = vmul.f32 %v731, %v779
    %v818 = vmul.f32 %v732, %v780
    %v819 = vmul.f32 %v733, %v781
    %v820 = vmul.f32 %v734, %v782
    %v821 = vmul.f32 %v735, %v783
    %v822 = vmul.f32 %v736, %v784
    %v823 = vmul.f32 %v737, %v785
    %v824 = vmul.f32 %v738, %v786
    %v825 = vmul.f32 %v739, %v787
    %v826 = vmul.f32 %v740, %v788
    %v827 = vmul.f32 %v741, %v789
    %v828 = vmul.f32 %v742, %v790
    %v829 = vmul.f32 %v743, %v791
    %v830 = vmul.f32 %v744, %v792
    %v831 = vmul.f32 %v815, %v814
    %v832 = vmul.f32 %v816, %v814
    %v833 = vmul.f32 %v817, %v814
    %v834 = vmul.f32 %v818, %v814
    %v835 = vmul.f32 %v819, %v814
    %v836 = vmul.f32 %v820, %v814
    %v837 = vmul.f32 %v821, %v814
    %v838 = vmul.f32 %v822, %v814
    %v839 = vmul.f32 %v823, %v814
    %v840 = vmul.f32 %v824, %v814
    %v841 = vmul.f32 %v825, %v814
    %v842 = vmul.f32 %v826, %v814
    %v843 = vmul.f32 %v827, %v814
    %v844 = vmul.f32 %v828, %v814
    %v845 = vmul.f32 %v829, %v814
    %v846 = vmul.f32 %v830, %v814
    %v847 = vld [vmem:[%s2] sm:$0xff]
    %v848 = vld [vmem:[%s2 + $0x8] sm:$0xff]
    %v849 = vld [vmem:[%s2 + $0x10] sm:$0xff]
    %v850 = vld [vmem:[%s2 + $0x18] sm:$0xff]
    %v851 = vld [vmem:[%s2 + $0x20] sm:$0xff]
    %v852 = vld [vmem:[%s2 + $0x28] sm:$0xff]
    %v853 = vld [vmem:[%s2 + $0x30] sm:$0xff]
    %v854 = vld [vmem:[%s2 + $0x38] sm:$0xff]
    %v855 = vld [vmem:[%s2 + $0x40] sm:$0xff]
    %v856 = vld [vmem:[%s2 + $0x48] sm:$0xff]
    %v857 = vld [vmem:[%s2 + $0x50] sm:$0xff]
    %v858 = vld [vmem:[%s2 + $0x58] sm:$0xff]
    %v859 = vld [vmem:[%s2 + $0x60] sm:$0xff]
    %v860 = vld [vmem:[%s2 + $0x68] sm:$0xff]
    %v861 = vld [vmem:[%s2 + $0x70] sm:$0xff]
    %v862 = vld [vmem:[%s2 + $0x78] sm:$0xff]
    %v863 = vld [vmem:[%s2 + $0x80] sm:$0xff]
    %v864 = vld [vmem:[%s2 + $0x88] sm:$0xff]
    %v865 = vld [vmem:[%s2 + $0x90] sm:$0xff]
    %v866 = vld [vmem:[%s2 + $0x98] sm:$0xff]
    %v867 = vld [vmem:[%s2 + $0xa0] sm:$0xff]
    %v868 = vld [vmem:[%s2 + $0xa8] sm:$0xff]
    %v869 = vld [vmem:[%s2 + $0xb0] sm:$0xff]
    %v870 = vld [vmem:[%s2 + $0xb8] sm:$0xff]
    %v871 = vld [vmem:[%s2 + $0xc0] sm:$0xff]
    %v872 = vld [vmem:[%s2 + $0xc8] sm:$0xff]
    %v873 = vld [vmem:[%s2 + $0xd0] sm:$0xff]
    %v874 = vld [vmem:[%s2 + $0xd8] sm:$0xff]
    %v875 = vld [vmem:[%s2 + $0xe0] sm:$0xff]
    %v876 = vld [vmem:[%s2 + $0xe8] sm:$0xff]
    %v877 = vld [vmem:[%s2 + $0xf0] sm:$0xff]
    %v878 = vld [vmem:[%s2 + $0xf8] sm:$0xff]
    %v879 = vld [vmem:[#allocation7] sm:$0xff]
    %v880 = vld [vmem:[#allocation7 + $0x8] sm:$0xff]
    %v881 = vld [vmem:[#allocation7 + $0x10] sm:$0xff]
    %v882 = vld [vmem:[#allocation7 + $0x18] sm:$0xff]
    %v883 = vld [vmem:[#allocation7 + $0x20] sm:$0xff]
    %v884 = vld [vmem:[#allocation7 + $0x28] sm:$0xff]
    %v885 = vld [vmem:[#allocation7 + $0x30] sm:$0xff]
    %v886 = vld [vmem:[#allocation7 + $0x38] sm:$0xff]
    %v887 = vld [vmem:[#allocation7 + $0x40] sm:$0xff]
    %v888 = vld [vmem:[#allocation7 + $0x48] sm:$0xff]
    %v889 = vld [vmem:[#allocation7 + $0x50] sm:$0xff]
    %v890 = vld [vmem:[#allocation7 + $0x58] sm:$0xff]
    %v891 = vld [vmem:[#allocation7 + $0x60] sm:$0xff]
    %v892 = vld [vmem:[#allocation7 + $0x68] sm:$0xff]
    %v893 = vld [vmem:[#allocation7 + $0x70] sm:$0xff]
    %v894 = vld [vmem:[#allocation7 + $0x78] sm:$0xff]
    %v895 = vld [vmem:[#allocation7 + $0x80] sm:$0xff]
    %v896 = vld [vmem:[#allocation7 + $0x88] sm:$0xff]
    %v897 = vld [vmem:[#allocation7 + $0x90] sm:$0xff]
    %v898 = vld [vmem:[#allocation7 + $0x98] sm:$0xff]
    %v899 = vld [vmem:[#allocation7 + $0xa0] sm:$0xff]
    %v900 = vld [vmem:[#allocation7 + $0xa8] sm:$0xff]
    %v901 = vld [vmem:[#allocation7 + $0xb0] sm:$0xff]
    %v902 = vld [vmem:[#allocation7 + $0xb8] sm:$0xff]
    %v903 = vld [vmem:[#allocation7 + $0xc0] sm:$0xff]
    %v904 = vld [vmem:[#allocation7 + $0xc8] sm:$0xff]
    %v905 = vld [vmem:[#allocation7 + $0xd0] sm:$0xff]
    %v906 = vld [vmem:[#allocation7 + $0xd8] sm:$0xff]
    %v907 = vld [vmem:[#allocation7 + $0xe0] sm:$0xff]
    %v908 = vld [vmem:[#allocation7 + $0xe8] sm:$0xff]
    %v909 = vld [vmem:[#allocation7 + $0xf0] sm:$0xff]
    %v910 = vld [vmem:[#allocation7 + $0xf8] sm:$0xff]
    %911 = vmatprep.subr.mxu0 0.0
    %912 = vmatpush1.msra.mxu0 %v879
    %913 = vmatprep.subr.mxu0 0.0
    %914 = vmatpush1.msra.mxu0 %v880
    %915 = vmatprep.subr.mxu0 0.0
    %916 = vmatpush1.msra.mxu0 %v881
    %917 = vmatprep.subr.mxu0 0.0
    %918 = vmatpush1.msra.mxu0 %v882
    %919 = vmatprep.subr.mxu0 0.0
    %920 = vmatpush1.msra.mxu0 %v883
    %921 = vmatprep.subr.mxu0 0.0
    %922 = vmatpush1.msra.mxu0 %v884
    %923 = vmatprep.subr.mxu0 0.0
    %924 = vmatpush1.msra.mxu0 %v885
    %925 = vmatprep.subr.mxu0 0.0
    %926 = vmatpush1.msra.mxu0 %v886
    %927 = vmatprep.subr.mxu0 0.0
    %928 = vmatpush1.msra.mxu0 %v887
    %929 = vmatprep.subr.mxu0 0.0
    %930 = vmatpush1.msra.mxu0 %v888
    %931 = vmatprep.subr.mxu0 0.0
    %932 = vmatpush1.msra.mxu0 %v889
    %933 = vmatprep.subr.mxu0 0.0
    %934 = vmatpush1.msra.mxu0 %v890
    %935 = vmatprep.subr.mxu0 0.0
    %936 = vmatpush1.msra.mxu0 %v891
    %937 = vmatprep.subr.mxu0 0.0
    %938 = vmatpush1.msra.mxu0 %v892
    %939 = vmatprep.subr.mxu0 0.0
    %940 = vmatpush1.msra.mxu0 %v893
    %941 = vmatprep.subr.mxu0 0.0
    %942 = vmatpush1.msra.mxu0 %v894
    %943 = vmatprep.subr.mxu0 0.0
    %944 = vmatpush1.msra.mxu0 %v895
    %945 = vmatprep.subr.mxu0 0.0
    %946 = vmatpush1.msra.mxu0 %v896
    %947 = vmatprep.subr.mxu0 0.0
    %948 = vmatpush1.msra.mxu0 %v897
    %949 = vmatprep.subr.mxu0 0.0
    %950 = vmatpush1.msra.mxu0 %v898
    %951 = vmatprep.subr.mxu0 0.0
    %952 = vmatpush1.msra.mxu0 %v899
    %953 = vmatprep.subr.mxu0 0.0
    %954 = vmatpush1.msra.mxu0 %v900
    %955 = vmatprep.subr.mxu0 0.0
    %956 = vmatpush1.msra.mxu0 %v901
    %957 = vmatprep.subr.mxu0 0.0
    %958 = vmatpush1.msra.mxu0 %v902
    %959 = vmatprep.subr.mxu0 0.0
    %960 = vmatpush1.msra.mxu0 %v903
    %961 = vmatprep.subr.mxu0 0.0
    %962 = vmatpush1.msra.mxu0 %v904
    %963 = vmatprep.subr.mxu0 0.0
    %964 = vmatpush1.msra.mxu0 %v905
    %965 = vmatprep.subr.mxu0 0.0
    %966 = vmatpush1.msra.mxu0 %v906
    %967 = vmatprep.subr.mxu0 0.0
    %968 = vmatpush1.msra.mxu0 %v907
    %969 = vmatprep.subr.mxu0 0.0
    %970 = vmatpush1.msra.mxu0 %v908
    %971 = vmatprep.subr.mxu0 0.0
    %972 = vmatpush1.msra.mxu0 %v909
    %973 = vmatprep.subr.mxu0 0.0
    %974 = vmatpush1.msra.mxu0 %v910
    %975 = vmatprep.mubr.f32.mxu0 %v848
    %976 = vmatmul.mubr.f32.gmra.mrb[0].mxu0 %v847
    %v977 = vpop.f32.mrb[0].mxu0
    %v978 = vadd.f32 0.0, %v977
    %v979 = vpop.f32.mrb[0].mxu0
    %980 = vmatprep.mubr.f32.mxu0 %v850
    %981 = vmatmul.mubr.f32.gmra.mrb[0].mxu0 %v849
    %v982 = vpop.f32.mrb[0].mxu0
    %v983 = vadd.f32 0.0, %v982
    %v984 = vpop.f32.mrb[0].mxu0
    %985 = vmatprep.mubr.f32.mxu0 %v852
    %986 = vmatmul.mubr.f32.gmra.mrb[0].mxu0 %v851
    %v987 = vpop.f32.mrb[0].mxu0
    %v988 = vadd.f32 0.0, %v987
    %v989 = vpop.f32.mrb[0].mxu0
    %990 = vmatprep.mubr.f32.mxu0 %v854
    %991 = vmatmul.mubr.f32.gmra.mrb[0].mxu0 %v853
    %v992 = vpop.f32.mrb[0].mxu0
    %v993 = vadd.f32 0.0, %v992
    %v994 = vpop.f32.mrb[0].mxu0
    %995 = vmatprep.mubr.f32.mxu0 %v856
    %996 = vmatmul.mubr.f32.gmra.mrb[0].mxu0 %v855
    %v997 = vpop.f32.mrb[0].mxu0
    %v998 = vadd.f32 0.0, %v997
    %v999 = vpop.f32.mrb[0].mxu0
    %1000 = vmatprep.mubr.f32.mxu0 %v858
    %1001 = vmatmul.mubr.f32.gmra.mrb[0].mxu0 %v857
    %v1002 = vpop.f32.mrb[0].mxu0
    %v1003 = vadd.f32 0.0, %v1002
    %v1004 = vpop.f32.mrb[0].mxu0
    %1005 = vmatprep.mubr.f32.mxu0 %v860
    %1006 = vmatmul.mubr.f32.gmra.mrb[0].mxu0 %v859
    %v1007 = vpop.f32.mrb[0].mxu0
    %v1008 = vadd.f32 0.0, %v1007
    %v1009 = vpop.f32.mrb[0].mxu0
    %1010 = vmatprep.mubr.f32.mxu0 %v862
    %1011 = vmatmul.mubr.f32.gmra.mrb[0].mxu0 %v861
    %v1012 = vpop.f32.mrb[0].mxu0
    %v1013 = vadd.f32 0.0, %v1012
    %v1014 = vpop.f32.mrb[0].mxu0
    %1015 = vmatprep.mubr.f32.mxu0 %v864
    %1016 = vmatmul.mubr.f32.gmra.mrb[0].mxu0 %v863
    %v1017 = vpop.f32.mrb[0].mxu0
    %v1018 = vadd.f32 0.0, %v1017
    %v1019 = vpop.f32.mrb[0].mxu0
    %1020 = vmatprep.mubr.f32.mxu0 %v866
    %1021 = vmatmul.mubr.f32.gmra.mrb[0].mxu0 %v865
    %v1022 = vpop.f32.mrb[0].mxu0
    %v1023 = vadd.f32 0.0, %v1022
    %v1024 = vpop.f32.mrb[0].mxu0
    %1025 = vmatprep.mubr.f32.mxu0 %v868
    %1026 = vmatmul.mubr.f32.gmra.mrb[0].mxu0 %v867
    %v1027 = vpop.f32.mrb[0].mxu0
    %v1028 = vadd.f32 0.0, %v1027
    %v1029 = vpop.f32.mrb[0].mxu0
    %1030 = vmatprep.mubr.f32.mxu0 %v870
    %1031 = vmatmul.mubr.f32.gmra.mrb[0].mxu0 %v869
    %v1032 = vpop.f32.mrb[0].mxu0
    %v1033 = vadd.f32 0.0, %v1032
    %v1034 = vpop.f32.mrb[0].mxu0
    %1035 = vmatprep.mubr.f32.mxu0 %v872
    %1036 = vmatmul.mubr.f32.gmra.mrb[0].mxu0 %v871
    %v1037 = vpop.f32.mrb[0].mxu0
    %v1038 = vadd.f32 0.0, %v1037
    %v1039 = vpop.f32.mrb[0].mxu0
    %1040 = vmatprep.mubr.f32.mxu0 %v874
    %1041 = vmatmul.mubr.f32.gmra.mrb[0].mxu0 %v873
    %v1042 = vpop.f32.mrb[0].mxu0
    %v1043 = vadd.f32 0.0, %v1042
    %v1044 = vpop.f32.mrb[0].mxu0
    %1045 = vmatprep.mubr.f32.mxu0 %v876
    %1046 = vmatmul.mubr.f32.gmra.mrb[0].mxu0 %v875
    %v1047 = vpop.f32.mrb[0].mxu0
    %v1048 = vadd.f32 0.0, %v1047
    %v1049 = vpop.f32.mrb[0].mxu0
    %1050 = vmatprep.mubr.f32.mxu0 %v878
    %1051 = vmatmul.mubr.f32.gmra.mrb[0].mxu0 %v877
    %v1052 = vpop.f32.mrb[0].mxu0
    %v1053 = vadd.f32 0.0, %v1052
    %v1054 = vpop.f32.mrb[0].mxu0
    %1055 = vdwg.mxu0
    %v1056 = vld [vmem:[%s6] sm:$0x1]
    %v1058 = vlaneseq
    %v1059 = vshrl.u32 %v1058, 7
    %v1060 = vsub.s32 0, %v1059
    %v1061 = vrot.slane %v1056, %v1060
    %1063 = vmatprep.subr.mxu0 0.0
    %1064 = vmatpush1.msra.mxu0 %v978
    %1065 = vmatprep.subr.mxu0 0.0
    %1066 = vmatpush1.msra.mxu0 %v983
    %1067 = vmatprep.subr.mxu0 0.0
    %1068 = vmatpush1.msra.mxu0 %v988
    %1069 = vmatprep.subr.mxu0 0.0
    %1070 = vmatpush1.msra.mxu0 %v993
    %1071 = vmatprep.subr.mxu0 0.0
    %1072 = vmatpush1.msra.mxu0 %v998
    %1073 = vmatprep.subr.mxu0 0.0
    %1074 = vmatpush1.msra.mxu0 %v1003
    %1075 = vmatprep.subr.mxu0 0.0
    %1076 = vmatpush1.msra.mxu0 %v1008
    %1077 = vmatprep.subr.mxu0 0.0
    %1078 = vmatpush1.msra.mxu0 %v1013
    %1079 = vmatprep.subr.mxu0 0.0
    %1080 = vmatpush1.msra.mxu0 %v1018
    %1081 = vmatprep.subr.mxu0 0.0
    %1082 = vmatpush1.msra.mxu0 %v1023
    %1083 = vmatprep.subr.mxu0 0.0
    %1084 = vmatpush1.msra.mxu0 %v1028
    %1085 = vmatprep.subr.mxu0 0.0
    %1086 = vmatpush1.msra.mxu0 %v1033
    %1087 = vmatprep.subr.mxu0 0.0
    %1088 = vmatpush1.msra.mxu0 %v1038
    %1089 = vmatprep.subr.mxu0 0.0
    %1090 = vmatpush1.msra.mxu0 %v1043
    %1091 = vmatprep.subr.mxu0 0.0
    %1092 = vmatpush1.msra.mxu0 %v1048
    %1093 = vmatprep.subr.mxu0 0.0
    %1094 = vmatpush1.msra.mxu0 %v1053
    %1095 = vmatprep.subr.mxu0 0.0
    %1096 = vmatpush1.msra.mxu0 0.0
    %1097 = vmatprep.subr.mxu0 0.0
    %1098 = vmatpush1.msra.mxu0 0.0
    %1099 = vmatprep.subr.mxu0 0.0
    %1100 = vmatpush1.msra.mxu0 0.0
    %1101 = vmatprep.subr.mxu0 0.0
    %1102 = vmatpush1.msra.mxu0 0.0
    %1103 = vmatprep.subr.mxu0 0.0
    %1104 = vmatpush1.msra.mxu0 0.0
    %1105 = vmatprep.subr.mxu0 0.0
    %1106 = vmatpush1.msra.mxu0 0.0
    %1107 = vmatprep.subr.mxu0 0.0
    %1108 = vmatpush1.msra.mxu0 0.0
    %1109 = vmatprep.subr.mxu0 0.0
    %1110 = vmatpush1.msra.mxu0 0.0
    %1111 = vmatprep.subr.mxu0 0.0
    %1112 = vmatpush1.msra.mxu0 0.0
    %1113 = vmatprep.subr.mxu0 0.0
    %1114 = vmatpush1.msra.mxu0 0.0
    %1115 = vmatprep.subr.mxu0 0.0
    %1116 = vmatpush1.msra.mxu0 0.0
    %1117 = vmatprep.subr.mxu0 0.0
    %1118 = vmatpush1.msra.mxu0 0.0
    %1119 = vmatprep.subr.mxu0 0.0
    %1120 = vmatpush1.msra.mxu0 0.0
    %1121 = vmatprep.subr.mxu0 0.0
    %1122 = vmatpush1.msra.mxu0 0.0
    %1123 = vmatprep.subr.mxu0 0.0
    %1124 = vmatpush1.msra.mxu0 0.0
    %1125 = vmatprep.subr.mxu0 0.0
    %1126 = vmatpush1.msra.mxu0 0.0
    %1127 = vmatprep.mubr.f32.mxu0 0.0
    %1128 = vmatmul.mubr.f32.gmra.mrb[0].mxu0 %v831
    %v1129 = vpop.f32.mrb[0].mxu0
    %v1130 = vadd.f32 %v1061, %v1129
    %v1131 = vpop.f32.mrb[0].mxu0
    %1132 = vmatprep.mubr.f32.mxu0 0.0
    %1133 = vmatmul.mubr.f32.gmra.mrb[0].mxu0 %v832
    %v1134 = vpop.f32.mrb[0].mxu0
    %v1135 = vadd.f32 %v1061, %v1134
    %v1136 = vpop.f32.mrb[0].mxu0
    %1137 = vmatprep.mubr.f32.mxu0 0.0
    %1138 = vmatmul.mubr.f32.gmra.mrb[0].mxu0 %v833
    %v1139 = vpop.f32.mrb[0].mxu0
    %v1140 = vadd.f32 %v1061, %v1139
    %v1141 = vpop.f32.mrb[0].mxu0
    %1142 = vmatprep.mubr.f32.mxu0 0.0
    %1143 = vmatmul.mubr.f32.gmra.mrb[0].mxu0 %v834
    %v1144 = vpop.f32.mrb[0].mxu0
    %v1145 = vadd.f32 %v1061, %v1144
    %v1146 = vpop.f32.mrb[0].mxu0
    %1147 = vmatprep.mubr.f32.mxu0 0.0
    %1148 = vmatmul.mubr.f32.gmra.mrb[0].mxu0 %v835
    %v1149 = vpop.f32.mrb[0].mxu0
    %v1150 = vadd.f32 %v1061, %v1149
    %v1151 = vpop.f32.mrb[0].mxu0
    %1152 = vmatprep.mubr.f32.mxu0 0.0
    %1153 = vmatmul.mubr.f32.gmra.mrb[0].mxu0 %v836
    %v1154 = vpop.f32.mrb[0].mxu0
    %v1155 = vadd.f32 %v1061, %v1154
    %v1156 = vpop.f32.mrb[0].mxu0
    %1157 = vmatprep.mubr.f32.mxu0 0.0
    %1158 = vmatmul.mubr.f32.gmra.mrb[0].mxu0 %v837
    %v1159 = vpop.f32.mrb[0].mxu0
    %v1160 = vadd.f32 %v1061, %v1159
    %v1161 = vpop.f32.mrb[0].mxu0
    %1162 = vmatprep.mubr.f32.mxu0 0.0
    %1163 = vmatmul.mubr.f32.gmra.mrb[0].mxu0 %v838
    %v1164 = vpop.f32.mrb[0].mxu0
    %v1165 = vadd.f32 %v1061, %v1164
    %v1166 = vpop.f32.mrb[0].mxu0
    %1167 = vmatprep.mubr.f32.mxu0 0.0
    %1168 = vmatmul.mubr.f32.gmra.mrb[0].mxu0 %v839
    %v1169 = vpop.f32.mrb[0].mxu0
    %v1170 = vadd.f32 %v1061, %v1169
    %v1171 = vpop.f32.mrb[0].mxu0
    %1172 = vmatprep.mubr.f32.mxu0 0.0
    %1173 = vmatmul.mubr.f32.gmra.mrb[0].mxu0 %v840
    %v1174 = vpop.f32.mrb[0].mxu0
    %v1175 = vadd.f32 %v1061, %v1174
    %v1176 = vpop.f32.mrb[0].mxu0
    %1177 = vmatprep.mubr.f32.mxu0 0.0
    %1178 = vmatmul.mubr.f32.gmra.mrb[0].mxu0 %v841
    %v1179 = vpop.f32.mrb[0].mxu0
    %v1180 = vadd.f32 %v1061, %v1179
    %v1181 = vpop.f32.mrb[0].mxu0
    %1182 = vmatprep.mubr.f32.mxu0 0.0
    %1183 = vmatmul.mubr.f32.gmra.mrb[0].mxu0 %v842
    %v1184 = vpop.f32.mrb[0].mxu0
    %v1185 = vadd.f32 %v1061, %v1184
    %v1186 = vpop.f32.mrb[0].mxu0
    %1187 = vmatprep.mubr.f32.mxu0 0.0
    %1188 = vmatmul.mubr.f32.gmra.mrb[0].mxu0 %v843
    %v1189 = vpop.f32.mrb[0].mxu0
    %v1190 = vadd.f32 %v1061, %v1189
    %v1191 = vpop.f32.mrb[0].mxu0
    %1192 = vmatprep.mubr.f32.mxu0 0.0
    %1193 = vmatmul.mubr.f32.gmra.mrb[0].mxu0 %v844
    %v1194 = vpop.f32.mrb[0].mxu0
    %v1195 = vadd.f32 %v1061, %v1194
    %v1196 = vpop.f32.mrb[0].mxu0
    %1197 = vmatprep.mubr.f32.mxu0 0.0
    %1198 = vmatmul.mubr.f32.gmra.mrb[0].mxu0 %v845
    %v1199 = vpop.f32.mrb[0].mxu0
    %v1200 = vadd.f32 %v1061, %v1199
    %v1201 = vpop.f32.mrb[0].mxu0
    %1202 = vmatprep.mubr.f32.mxu0 0.0
    %1203 = vmatmul.mubr.f32.gmra.mrb[0].mxu0 %v846
    %v1204 = vpop.f32.mrb[0].mxu0
    %v1205 = vadd.f32 %v1061, %v1204
    %v1206 = vpop.f32.mrb[0].mxu0
    %1207 = vdwg.mxu0
    %v1208 = vmax.f32 %v1130, 0.0
    %v1209 = vmax.f32 %v1135, 0.0
    %v1210 = vmax.f32 %v1140, 0.0
    %v1211 = vmax.f32 %v1145, 0.0
    %v1212 = vmax.f32 %v1150, 0.0
    %v1213 = vmax.f32 %v1155, 0.0
    %v1214 = vmax.f32 %v1160, 0.0
    %v1215 = vmax.f32 %v1165, 0.0
    %v1216 = vmax.f32 %v1170, 0.0
    %v1217 = vmax.f32 %v1175, 0.0
    %v1218 = vmax.f32 %v1180, 0.0
    %v1219 = vmax.f32 %v1185, 0.0
    %v1220 = vmax.f32 %v1190, 0.0
    %v1221 = vmax.f32 %v1195, 0.0
    %v1222 = vmax.f32 %v1200, 0.0
    %v1223 = vmax.f32 %v1205, 0.0
    %v1224 = vld [vmem:[#allocation2] sm:$0xff]
    %v1225 = vld [vmem:[#allocation2 + $0x8] sm:$0xff]
    %v1226 = vld [vmem:[#allocation2 + $0x10] sm:$0xff]
    %v1227 = vld [vmem:[#allocation2 + $0x18] sm:$0xff]
    %v1228 = vld [vmem:[#allocation2 + $0x20] sm:$0xff]
    %v1229 = vld [vmem:[#allocation2 + $0x28] sm:$0xff]
    %v1230 = vld [vmem:[#allocation2 + $0x30] sm:$0xff]
    %v1231 = vld [vmem:[#allocation2 + $0x38] sm:$0xff]
    %v1232 = vld [vmem:[#allocation2 + $0x40] sm:$0xff]
    %v1233 = vld [vmem:[#allocation2 + $0x48] sm:$0xff]
    %v1234 = vld [vmem:[#allocation2 + $0x50] sm:$0xff]
    %v1235 = vld [vmem:[#allocation2 + $0x58] sm:$0xff]
    %v1236 = vld [vmem:[#allocation2 + $0x60] sm:$0xff]
    %v1237 = vld [vmem:[#allocation2 + $0x68] sm:$0xff]
    %v1238 = vld [vmem:[#allocation2 + $0x70] sm:$0xff]
    %v1239 = vld [vmem:[#allocation2 + $0x78] sm:$0xff]
    %v1240 = vmul.f32 %v1208, %v1224
    %v1241 = vmul.f32 %v1209, %v1225
    %v1242 = vmul.f32 %v1210, %v1226
    %v1243 = vmul.f32 %v1211, %v1227
    %v1244 = vmul.f32 %v1212, %v1228
    %v1245 = vmul.f32 %v1213, %v1229
    %v1246 = vmul.f32 %v1214, %v1230
    %v1247 = vmul.f32 %v1215, %v1231
    %v1248 = vmul.f32 %v1216, %v1232
    %v1249 = vmul.f32 %v1217, %v1233
    %v1250 = vmul.f32 %v1218, %v1234
    %v1251 = vmul.f32 %v1219, %v1235
    %v1252 = vmul.f32 %v1220, %v1236
    %v1253 = vmul.f32 %v1221, %v1237
    %v1254 = vmul.f32 %v1222, %v1238
    %v1255 = vmul.f32 %v1223, %v1239
    %v1256 = vld [vmem:[#allocation8] sm:$0xff]
    %v1257 = vld [vmem:[#allocation8 + $0x8] sm:$0xff]
    %v1258 = vld [vmem:[#allocation8 + $0x10] sm:$0xff]
    %v1259 = vld [vmem:[#allocation8 + $0x18] sm:$0xff]
    %v1260 = vld [vmem:[#allocation8 + $0x20] sm:$0xff]
    %v1261 = vld [vmem:[#allocation8 + $0x28] sm:$0xff]
    %v1262 = vld [vmem:[#allocation8 + $0x30] sm:$0xff]
    %v1263 = vld [vmem:[#allocation8 + $0x38] sm:$0xff]
    %v1264 = vld [vmem:[#allocation8 + $0x40] sm:$0xff]
    %v1265 = vld [vmem:[#allocation8 + $0x48] sm:$0xff]
    %v1266 = vld [vmem:[#allocation8 + $0x50] sm:$0xff]
    %v1267 = vld [vmem:[#allocation8 + $0x58] sm:$0xff]
    %v1268 = vld [vmem:[#allocation8 + $0x60] sm:$0xff]
    %v1269 = vld [vmem:[#allocation8 + $0x68] sm:$0xff]
    %v1270 = vld [vmem:[#allocation8 + $0x70] sm:$0xff]
    %v1271 = vld [vmem:[#allocation8 + $0x78] sm:$0xff]
    %1272 = vmatprep.subr.mxu0 0.0
    %1273 = vmatpush1.msra.mxu0 %v1256
    %1274 = vmatprep.subr.mxu0 0.0
    %1275 = vmatpush1.msra.mxu0 %v1257
    %1276 = vmatprep.subr.mxu0 0.0
    %1277 = vmatpush1.msra.mxu0 %v1258
    %1278 = vmatprep.subr.mxu0 0.0
    %1279 = vmatpush1.msra.mxu0 %v1259
    %1280 = vmatprep.subr.mxu0 0.0
    %1281 = vmatpush1.msra.mxu0 %v1260
    %1282 = vmatprep.subr.mxu0 0.0
    %1283 = vmatpush1.msra.mxu0 %v1261
    %1284 = vmatprep.subr.mxu0 0.0
    %1285 = vmatpush1.msra.mxu0 %v1262
    %1286 = vmatprep.subr.mxu0 0.0
    %1287 = vmatpush1.msra.mxu0 %v1263
    %1288 = vmatprep.subr.mxu0 0.0
    %1289 = vmatpush1.msra.mxu0 %v1264
    %1290 = vmatprep.subr.mxu0 0.0
    %1291 = vmatpush1.msra.mxu0 %v1265
    %1292 = vmatprep.subr.mxu0 0.0
    %1293 = vmatpush1.msra.mxu0 %v1266
    %1294 = vmatprep.subr.mxu0 0.0
    %1295 = vmatpush1.msra.mxu0 %v1267
    %1296 = vmatprep.subr.mxu0 0.0
    %1297 = vmatpush1.msra.mxu0 %v1268
    %1298 = vmatprep.subr.mxu0 0.0
    %1299 = vmatpush1.msra.mxu0 %v1269
    %1300 = vmatprep.subr.mxu0 0.0
    %1301 = vmatpush1.msra.mxu0 %v1270
    %1302 = vmatprep.subr.mxu0 0.0
    %1303 = vmatpush1.msra.mxu0 %v1271
    %1304 = vmatprep.subr.mxu0 0.0
    %1305 = vmatpush1.msra.mxu0 0.0
    %1306 = vmatprep.subr.mxu0 0.0
    %1307 = vmatpush1.msra.mxu0 0.0
    %1308 = vmatprep.subr.mxu0 0.0
    %1309 = vmatpush1.msra.mxu0 0.0
    %1310 = vmatprep.subr.mxu0 0.0
    %1311 = vmatpush1.msra.mxu0 0.0
    %1312 = vmatprep.subr.mxu0 0.0
    %1313 = vmatpush1.msra.mxu0 0.0
    %1314 = vmatprep.subr.mxu0 0.0
    %1315 = vmatpush1.msra.mxu0 0.0
    %1316 = vmatprep.subr.mxu0 0.0
    %1317 = vmatpush1.msra.mxu0 0.0
    %1318 = vmatprep.subr.mxu0 0.0
    %1319 = vmatpush1.msra.mxu0 0.0
    %1320 = vmatprep.subr.mxu0 0.0
    %1321 = vmatpush1.msra.mxu0 0.0
    %1322 = vmatprep.subr.mxu0 0.0
    %1323 = vmatpush1.msra.mxu0 0.0
    %1324 = vmatprep.subr.mxu0 0.0
    %1325 = vmatpush1.msra.mxu0 0.0
    %1326 = vmatprep.subr.mxu0 0.0
    %1327 = vmatpush1.msra.mxu0 0.0
    %1328 = vmatprep.subr.mxu0 0.0
    %1329 = vmatpush1.msra.mxu0 0.0
    %1330 = vmatprep.subr.mxu0 0.0
    %1331 = vmatpush1.msra.mxu0 0.0
    %1332 = vmatprep.subr.mxu0 0.0
    %1333 = vmatpush1.msra.mxu0 0.0
    %1334 = vmatprep.subr.mxu0 0.0
    %1335 = vmatpush1.msra.mxu0 0.0
    %1336 = vmatprep.mubr.f32.mxu0 0.0
    %1337 = vmatmul.mubr.f32.gmra.mrb[0].mxu0 %v1240
    %v1338 = vpop.f32.mrb[0].mxu0
    %v1339 = vadd.f32 0.0, %v1338
    %v1340 = vpop.f32.mrb[0].mxu0
    %1341 = vmatprep.mubr.f32.mxu0 0.0
    %1342 = vmatmul.mubr.f32.gmra.mrb[0].mxu0 %v1241
    %v1343 = vpop.f32.mrb[0].mxu0
    %v1344 = vadd.f32 0.0, %v1343
    %v1345 = vpop.f32.mrb[0].mxu0
    %1346 = vmatprep.mubr.f32.mxu0 0.0
    %1347 = vmatmul.mubr.f32.gmra.mrb[0].mxu0 %v1242
    %v1348 = vpop.f32.mrb[0].mxu0
    %v1349 = vadd.f32 0.0, %v1348
    %v1350 = vpop.f32.mrb[0].mxu0
    %1351 = vmatprep.mubr.f32.mxu0 0.0
    %1352 = vmatmul.mubr.f32.gmra.mrb[0].mxu0 %v1243
    %v1353 = vpop.f32.mrb[0].mxu0
    %v1354 = vadd.f32 0.0, %v1353
    %v1355 = vpop.f32.mrb[0].mxu0
    %1356 = vmatprep.mubr.f32.mxu0 0.0
    %1357 = vmatmul.mubr.f32.gmra.mrb[0].mxu0 %v1244
    %v1358 = vpop.f32.mrb[0].mxu0
    %v1359 = vadd.f32 0.0, %v1358
    %v1360 = vpop.f32.mrb[0].mxu0
    %1361 = vmatprep.mubr.f32.mxu0 0.0
    %1362 = vmatmul.mubr.f32.gmra.mrb[0].mxu0 %v1245
    %v1363 = vpop.f32.mrb[0].mxu0
    %v1364 = vadd.f32 0.0, %v1363
    %v1365 = vpop.f32.mrb[0].mxu0
    %1366 = vmatprep.mubr.f32.mxu0 0.0
    %1367 = vmatmul.mubr.f32.gmra.mrb[0].mxu0 %v1246
    %v1368 = vpop.f32.mrb[0].mxu0
    %v1369 = vadd.f32 0.0, %v1368
    %v1370 = vpop.f32.mrb[0].mxu0
    %1371 = vmatprep.mubr.f32.mxu0 0.0
    %1372 = vmatmul.mubr.f32.gmra.mrb[0].mxu0 %v1247
    %v1373 = vpop.f32.mrb[0].mxu0
    %v1374 = vadd.f32 0.0, %v1373
    %v1375 = vpop.f32.mrb[0].mxu0
    %1376 = vmatprep.mubr.f32.mxu0 0.0
    %1377 = vmatmul.mubr.f32.gmra.mrb[0].mxu0 %v1248
    %v1378 = vpop.f32.mrb[0].mxu0
    %v1379 = vadd.f32 0.0, %v1378
    %v1380 = vpop.f32.mrb[0].mxu0
    %1381 = vmatprep.mubr.f32.mxu0 0.0
    %1382 = vmatmul.mubr.f32.gmra.mrb[0].mxu0 %v1249
    %v1383 = vpop.f32.mrb[0].mxu0
    %v1384 = vadd.f32 0.0, %v1383
    %v1385 = vpop.f32.mrb[0].mxu0
    %1386 = vmatprep.mubr.f32.mxu0 0.0
    %1387 = vmatmul.mubr.f32.gmra.mrb[0].mxu0 %v1250
    %v1388 = vpop.f32.mrb[0].mxu0
    %v1389 = vadd.f32 0.0, %v1388
    %v1390 = vpop.f32.mrb[0].mxu0
    %1391 = vmatprep.mubr.f32.mxu0 0.0
    %1392 = vmatmul.mubr.f32.gmra.mrb[0].mxu0 %v1251
    %v1393 = vpop.f32.mrb[0].mxu0
    %v1394 = vadd.f32 0.0, %v1393
    %v1395 = vpop.f32.mrb[0].mxu0
    %1396 = vmatprep.mubr.f32.mxu0 0.0
    %1397 = vmatmul.mubr.f32.gmra.mrb[0].mxu0 %v1252
    %v1398 = vpop.f32.mrb[0].mxu0
    %v1399 = vadd.f32 0.0, %v1398
    %v1400 = vpop.f32.mrb[0].mxu0
    %1401 = vmatprep.mubr.f32.mxu0 0.0
    %1402 = vmatmul.mubr.f32.gmra.mrb[0].mxu0 %v1253
    %v1403 = vpop.f32.mrb[0].mxu0
    %v1404 = vadd.f32 0.0, %v1403
    %v1405 = vpop.f32.mrb[0].mxu0
    %1406 = vmatprep.mubr.f32.mxu0 0.0
    %1407 = vmatmul.mubr.f32.gmra.mrb[0].mxu0 %v1254
    %v1408 = vpop.f32.mrb[0].mxu0
    %v1409 = vadd.f32 0.0, %v1408
    %v1410 = vpop.f32.mrb[0].mxu0
    %1411 = vmatprep.mubr.f32.mxu0 0.0
    %1412 = vmatmul.mubr.f32.gmra.mrb[0].mxu0 %v1255
    %v1413 = vpop.f32.mrb[0].mxu0
    %v1414 = vadd.f32 0.0, %v1413
    %v1415 = vpop.f32.mrb[0].mxu0
    %1416 = vdwg.mxu0
    %v1417 = vld [vmem:[%s8] sm:$0x1]
    %v1419 = vlaneseq
    %v1420 = vshrl.u32 %v1419, 7
    %v1421 = vsub.s32 0, %v1420
    %v1422 = vrot.slane %v1417, %v1421
    %1424 = vmatprep.subr.mxu0 0.0
    %1425 = vmatpush1.msra.mxu0 %v1339
    %1426 = vmatprep.subr.mxu0 0.0
    %1427 = vmatpush1.msra.mxu0 %v1344
    %1428 = vmatprep.subr.mxu0 0.0
    %1429 = vmatpush1.msra.mxu0 %v1349
    %1430 = vmatprep.subr.mxu0 0.0
    %1431 = vmatpush1.msra.mxu0 %v1354
    %1432 = vmatprep.subr.mxu0 0.0
    %1433 = vmatpush1.msra.mxu0 %v1359
    %1434 = vmatprep.subr.mxu0 0.0
    %1435 = vmatpush1.msra.mxu0 %v1364
    %1436 = vmatprep.subr.mxu0 0.0
    %1437 = vmatpush1.msra.mxu0 %v1369
    %1438 = vmatprep.subr.mxu0 0.0
    %1439 = vmatpush1.msra.mxu0 %v1374
    %1440 = vmatprep.subr.mxu0 0.0
    %1441 = vmatpush1.msra.mxu0 %v1379
    %1442 = vmatprep.subr.mxu0 0.0
    %1443 = vmatpush1.msra.mxu0 %v1384
    %1444 = vmatprep.subr.mxu0 0.0
    %1445 = vmatpush1.msra.mxu0 %v1389
    %1446 = vmatprep.subr.mxu0 0.0
    %1447 = vmatpush1.msra.mxu0 %v1394
    %1448 = vmatprep.subr.mxu0 0.0
    %1449 = vmatpush1.msra.mxu0 %v1399
    %1450 = vmatprep.subr.mxu0 0.0
    %1451 = vmatpush1.msra.mxu0 %v1404
    %1452 = vmatprep.subr.mxu0 0.0
    %1453 = vmatpush1.msra.mxu0 %v1409
    %1454 = vmatprep.subr.mxu0 0.0
    %1455 = vmatpush1.msra.mxu0 %v1414
    %1456 = vmatprep.subr.mxu0 0.0
    %1457 = vmatpush1.msra.mxu0 0.0
    %1458 = vmatprep.subr.mxu0 0.0
    %1459 = vmatpush1.msra.mxu0 0.0
    %1460 = vmatprep.subr.mxu0 0.0
    %1461 = vmatpush1.msra.mxu0 0.0
    %1462 = vmatprep.subr.mxu0 0.0
    %1463 = vmatpush1.msra.mxu0 0.0
    %1464 = vmatprep.subr.mxu0 0.0
    %1465 = vmatpush1.msra.mxu0 0.0
    %1466 = vmatprep.subr.mxu0 0.0
    %1467 = vmatpush1.msra.mxu0 0.0
    %1468 = vmatprep.subr.mxu0 0.0
    %1469 = vmatpush1.msra.mxu0 0.0
    %1470 = vmatprep.subr.mxu0 0.0
    %1471 = vmatpush1.msra.mxu0 0.0
    %1472 = vmatprep.subr.mxu0 0.0
    %1473 = vmatpush1.msra.mxu0 0.0
    %1474 = vmatprep.subr.mxu0 0.0
    %1475 = vmatpush1.msra.mxu0 0.0
    %1476 = vmatprep.subr.mxu0 0.0
    %1477 = vmatpush1.msra.mxu0 0.0
    %1478 = vmatprep.subr.mxu0 0.0
    %1479 = vmatpush1.msra.mxu0 0.0
    %1480 = vmatprep.subr.mxu0 0.0
    %1481 = vmatpush1.msra.mxu0 0.0
    %1482 = vmatprep.subr.mxu0 0.0
    %1483 = vmatpush1.msra.mxu0 0.0
    %1484 = vmatprep.subr.mxu0 0.0
    %1485 = vmatpush1.msra.mxu0 0.0
    %1486 = vmatprep.subr.mxu0 0.0
    %1487 = vmatpush1.msra.mxu0 0.0
    %1488 = vmatprep.mubr.f32.mxu0 0.0
    %1489 = vmatmul.mubr.f32.gmra.mrb[0].mxu0 %v831
    %v1490 = vpop.f32.mrb[0].mxu0
    %v1491 = vadd.f32 %v1422, %v1490
    %v1492 = vpop.f32.mrb[0].mxu0
    %1493 = vmatprep.mubr.f32.mxu0 0.0
    %1494 = vmatmul.mubr.f32.gmra.mrb[0].mxu0 %v832
    %v1495 = vpop.f32.mrb[0].mxu0
    %v1496 = vadd.f32 %v1422, %v1495
    %v1497 = vpop.f32.mrb[0].mxu0
    %1498 = vmatprep.mubr.f32.mxu0 0.0
    %1499 = vmatmul.mubr.f32.gmra.mrb[0].mxu0 %v833
    %v1500 = vpop.f32.mrb[0].mxu0
    %v1501 = vadd.f32 %v1422, %v1500
    %v1502 = vpop.f32.mrb[0].mxu0
    %1503 = vmatprep.mubr.f32.mxu0 0.0
    %1504 = vmatmul.mubr.f32.gmra.mrb[0].mxu0 %v834
    %v1505 = vpop.f32.mrb[0].mxu0
    %v1506 = vadd.f32 %v1422, %v1505
    %v1507 = vpop.f32.mrb[0].mxu0
    %1508 = vmatprep.mubr.f32.mxu0 0.0
    %1509 = vmatmul.mubr.f32.gmra.mrb[0].mxu0 %v835
    %v1510 = vpop.f32.mrb[0].mxu0
    %v1511 = vadd.f32 %v1422, %v1510
    %v1512 = vpop.f32.mrb[0].mxu0
    %1513 = vmatprep.mubr.f32.mxu0 0.0
    %1514 = vmatmul.mubr.f32.gmra.mrb[0].mxu0 %v836
    %v1515 = vpop.f32.mrb[0].mxu0
    %v1516 = vadd.f32 %v1422, %v1515
    %v1517 = vpop.f32.mrb[0].mxu0
    %1518 = vmatprep.mubr.f32.mxu0 0.0
    %1519 = vmatmul.mubr.f32.gmra.mrb[0].mxu0 %v837
    %v1520 = vpop.f32.mrb[0].mxu0
    %v1521 = vadd.f32 %v1422, %v1520
    %v1522 = vpop.f32.mrb[0].mxu0
    %1523 = vmatprep.mubr.f32.mxu0 0.0
    %1524 = vmatmul.mubr.f32.gmra.mrb[0].mxu0 %v838
    %v1525 = vpop.f32.mrb[0].mxu0
    %v1526 = vadd.f32 %v1422, %v1525
    %v1527 = vpop.f32.mrb[0].mxu0
    %1528 = vmatprep.mubr.f32.mxu0 0.0
    %1529 = vmatmul.mubr.f32.gmra.mrb[0].mxu0 %v839
    %v1530 = vpop.f32.mrb[0].mxu0
    %v1531 = vadd.f32 %v1422, %v1530
    %v1532 = vpop.f32.mrb[0].mxu0
    %1533 = vmatprep.mubr.f32.mxu0 0.0
    %1534 = vmatmul.mubr.f32.gmra.mrb[0].mxu0 %v840
    %v1535 = vpop.f32.mrb[0].mxu0
    %v1536 = vadd.f32 %v1422, %v1535
    %v1537 = vpop.f32.mrb[0].mxu0
    %1538 = vmatprep.mubr.f32.mxu0 0.0
    %1539 = vmatmul.mubr.f32.gmra.mrb[0].mxu0 %v841
    %v1540 = vpop.f32.mrb[0].mxu0
    %v1541 = vadd.f32 %v1422, %v1540
    %v1542 = vpop.f32.mrb[0].mxu0
    %1543 = vmatprep.mubr.f32.mxu0 0.0
    %1544 = vmatmul.mubr.f32.gmra.mrb[0].mxu0 %v842
    %v1545 = vpop.f32.mrb[0].mxu0
    %v1546 = vadd.f32 %v1422, %v1545
    %v1547 = vpop.f32.mrb[0].mxu0
    %1548 = vmatprep.mubr.f32.mxu0 0.0
    %1549 = vmatmul.mubr.f32.gmra.mrb[0].mxu0 %v843
    %v1550 = vpop.f32.mrb[0].mxu0
    %v1551 = vadd.f32 %v1422, %v1550
    %v1552 = vpop.f32.mrb[0].mxu0
    %1553 = vmatprep.mubr.f32.mxu0 0.0
    %1554 = vmatmul.mubr.f32.gmra.mrb[0].mxu0 %v844
    %v1555 = vpop.f32.mrb[0].mxu0
    %v1556 = vadd.f32 %v1422, %v1555
    %v1557 = vpop.f32.mrb[0].mxu0
    %1558 = vmatprep.mubr.f32.mxu0 0.0
    %1559 = vmatmul.mubr.f32.gmra.mrb[0].mxu0 %v845
    %v1560 = vpop.f32.mrb[0].mxu0
    %v1561 = vadd.f32 %v1422, %v1560
    %v1562 = vpop.f32.mrb[0].mxu0
    %1563 = vmatprep.mubr.f32.mxu0 0.0
    %1564 = vmatmul.mubr.f32.gmra.mrb[0].mxu0 %v846
    %v1565 = vpop.f32.mrb[0].mxu0
    %v1566 = vadd.f32 %v1422, %v1565
    %v1567 = vpop.f32.mrb[0].mxu0
    %1568 = vdwg.mxu0
    %v1569 = vmax.f32 %v1491, 0.0
    %v1570 = vmax.f32 %v1496, 0.0
    %v1571 = vmax.f32 %v1501, 0.0
    %v1572 = vmax.f32 %v1506, 0.0
    %v1573 = vmax.f32 %v1511, 0.0
    %v1574 = vmax.f32 %v1516, 0.0
    %v1575 = vmax.f32 %v1521, 0.0
    %v1576 = vmax.f32 %v1526, 0.0
    %v1577 = vmax.f32 %v1531, 0.0
    %v1578 = vmax.f32 %v1536, 0.0
    %v1579 = vmax.f32 %v1541, 0.0
    %v1580 = vmax.f32 %v1546, 0.0
    %v1581 = vmax.f32 %v1551, 0.0
    %v1582 = vmax.f32 %v1556, 0.0
    %v1583 = vmax.f32 %v1561, 0.0
    %v1584 = vmax.f32 %v1566, 0.0
    %v1585 = vld [vmem:[#allocation5] sm:$0xff]
    %v1586 = vld [vmem:[#allocation5 + $0x8] sm:$0xff]
    %v1587 = vld [vmem:[#allocation5 + $0x10] sm:$0xff]
    %v1588 = vld [vmem:[#allocation5 + $0x18] sm:$0xff]
    %v1589 = vld [vmem:[#allocation5 + $0x20] sm:$0xff]
    %v1590 = vld [vmem:[#allocation5 + $0x28] sm:$0xff]
    %v1591 = vld [vmem:[#allocation5 + $0x30] sm:$0xff]
    %v1592 = vld [vmem:[#allocation5 + $0x38] sm:$0xff]
    %v1593 = vld [vmem:[#allocation5 + $0x40] sm:$0xff]
    %v1594 = vld [vmem:[#allocation5 + $0x48] sm:$0xff]
    %v1595 = vld [vmem:[#allocation5 + $0x50] sm:$0xff]
    %v1596 = vld [vmem:[#allocation5 + $0x58] sm:$0xff]
    %v1597 = vld [vmem:[#allocation5 + $0x60] sm:$0xff]
    %v1598 = vld [vmem:[#allocation5 + $0x68] sm:$0xff]
    %v1599 = vld [vmem:[#allocation5 + $0x70] sm:$0xff]
    %v1600 = vld [vmem:[#allocation5 + $0x78] sm:$0xff]
    %v1601 = vmul.f32 %v1569, %v1585
    %v1602 = vmul.f32 %v1570, %v1586
    %v1603 = vmul.f32 %v1571, %v1587
    %v1604 = vmul.f32 %v1572, %v1588
    %v1605 = vmul.f32 %v1573, %v1589
    %v1606 = vmul.f32 %v1574, %v1590
    %v1607 = vmul.f32 %v1575, %v1591
    %v1608 = vmul.f32 %v1576, %v1592
    %v1609 = vmul.f32 %v1577, %v1593
    %v1610 = vmul.f32 %v1578, %v1594
    %v1611 = vmul.f32 %v1579, %v1595
    %v1612 = vmul.f32 %v1580, %v1596
    %v1613 = vmul.f32 %v1581, %v1597
    %v1614 = vmul.f32 %v1582, %v1598
    %v1615 = vmul.f32 %v1583, %v1599
    %v1616 = vmul.f32 %v1584, %v1600
    %v1617 = vld [vmem:[#allocation10] sm:$0xff]
    %v1618 = vld [vmem:[#allocation10 + $0x8] sm:$0xff]
    %v1619 = vld [vmem:[#allocation10 + $0x10] sm:$0xff]
    %v1620 = vld [vmem:[#allocation10 + $0x18] sm:$0xff]
    %v1621 = vld [vmem:[#allocation10 + $0x20] sm:$0xff]
    %v1622 = vld [vmem:[#allocation10 + $0x28] sm:$0xff]
    %v1623 = vld [vmem:[#allocation10 + $0x30] sm:$0xff]
    %v1624 = vld [vmem:[#allocation10 + $0x38] sm:$0xff]
    %v1625 = vld [vmem:[#allocation10 + $0x40] sm:$0xff]
    %v1626 = vld [vmem:[#allocation10 + $0x48] sm:$0xff]
    %v1627 = vld [vmem:[#allocation10 + $0x50] sm:$0xff]
    %v1628 = vld [vmem:[#allocation10 + $0x58] sm:$0xff]
    %v1629 = vld [vmem:[#allocation10 + $0x60] sm:$0xff]
    %v1630 = vld [vmem:[#allocation10 + $0x68] sm:$0xff]
    %v1631 = vld [vmem:[#allocation10 + $0x70] sm:$0xff]
    %v1632 = vld [vmem:[#allocation10 + $0x78] sm:$0xff]
    %1633 = vmatprep.subr.mxu0 0.0
    %1634 = vmatpush1.msra.mxu0 %v1617
    %1635 = vmatprep.subr.mxu0 0.0
    %1636 = vmatpush1.msra.mxu0 %v1618
    %1637 = vmatprep.subr.mxu0 0.0
    %1638 = vmatpush1.msra.mxu0 %v1619
    %1639 = vmatprep.subr.mxu0 0.0
    %1640 = vmatpush1.msra.mxu0 %v1620
    %1641 = vmatprep.subr.mxu0 0.0
    %1642 = vmatpush1.msra.mxu0 %v1621
    %1643 = vmatprep.subr.mxu0 0.0
    %1644 = vmatpush1.msra.mxu0 %v1622
    %1645 = vmatprep.subr.mxu0 0.0
    %1646 = vmatpush1.msra.mxu0 %v1623
    %1647 = vmatprep.subr.mxu0 0.0
    %1648 = vmatpush1.msra.mxu0 %v1624
    %1649 = vmatprep.subr.mxu0 0.0
    %1650 = vmatpush1.msra.mxu0 %v1625
    %1651 = vmatprep.subr.mxu0 0.0
    %1652 = vmatpush1.msra.mxu0 %v1626
    %1653 = vmatprep.subr.mxu0 0.0
    %1654 = vmatpush1.msra.mxu0 %v1627
    %1655 = vmatprep.subr.mxu0 0.0
    %1656 = vmatpush1.msra.mxu0 %v1628
    %1657 = vmatprep.subr.mxu0 0.0
    %1658 = vmatpush1.msra.mxu0 %v1629
    %1659 = vmatprep.subr.mxu0 0.0
    %1660 = vmatpush1.msra.mxu0 %v1630
    %1661 = vmatprep.subr.mxu0 0.0
    %1662 = vmatpush1.msra.mxu0 %v1631
    %1663 = vmatprep.subr.mxu0 0.0
    %1664 = vmatpush1.msra.mxu0 %v1632
    %1665 = vmatprep.subr.mxu0 0.0
    %1666 = vmatpush1.msra.mxu0 0.0
    %1667 = vmatprep.subr.mxu0 0.0
    %1668 = vmatpush1.msra.mxu0 0.0
    %1669 = vmatprep.subr.mxu0 0.0
    %1670 = vmatpush1.msra.mxu0 0.0
    %1671 = vmatprep.subr.mxu0 0.0
    %1672 = vmatpush1.msra.mxu0 0.0
    %1673 = vmatprep.subr.mxu0 0.0
    %1674 = vmatpush1.msra.mxu0 0.0
    %1675 = vmatprep.subr.mxu0 0.0
    %1676 = vmatpush1.msra.mxu0 0.0
    %1677 = vmatprep.subr.mxu0 0.0
    %1678 = vmatpush1.msra.mxu0 0.0
    %1679 = vmatprep.subr.mxu0 0.0
    %1680 = vmatpush1.msra.mxu0 0.0
    %1681 = vmatprep.subr.mxu0 0.0
    %1682 = vmatpush1.msra.mxu0 0.0
    %1683 = vmatprep.subr.mxu0 0.0
    %1684 = vmatpush1.msra.mxu0 0.0
    %1685 = vmatprep.subr.mxu0 0.0
    %1686 = vmatpush1.msra.mxu0 0.0
    %1687 = vmatprep.subr.mxu0 0.0
    %1688 = vmatpush1.msra.mxu0 0.0
    %1689 = vmatprep.subr.mxu0 0.0
    %1690 = vmatpush1.msra.mxu0 0.0
    %1691 = vmatprep.subr.mxu0 0.0
    %1692 = vmatpush1.msra.mxu0 0.0
    %1693 = vmatprep.subr.mxu0 0.0
    %1694 = vmatpush1.msra.mxu0 0.0
    %1695 = vmatprep.subr.mxu0 0.0
    %1696 = vmatpush1.msra.mxu0 0.0
    %1697 = vmatprep.mubr.f32.mxu0 0.0
    %1698 = vmatmul.mubr.f32.gmra.mrb[0].mxu0 %v1601
    %v1699 = vpop.f32.mrb[0].mxu0
    %v1700 = vadd.f32 0.0, %v1699
    %v1701 = vpop.f32.mrb[0].mxu0
    %1702 = vmatprep.mubr.f32.mxu0 0.0
    %1703 = vmatmul.mubr.f32.gmra.mrb[0].mxu0 %v1602
    %v1704 = vpop.f32.mrb[0].mxu0
    %v1705 = vadd.f32 0.0, %v1704
    %v1706 = vpop.f32.mrb[0].mxu0
    %1707 = vmatprep.mubr.f32.mxu0 0.0
    %1708 = vmatmul.mubr.f32.gmra.mrb[0].mxu0 %v1603
    %v1709 = vpop.f32.mrb[0].mxu0
    %v1710 = vadd.f32 0.0, %v1709
    %v1711 = vpop.f32.mrb[0].mxu0
    %1712 = vmatprep.mubr.f32.mxu0 0.0
    %1713 = vmatmul.mubr.f32.gmra.mrb[0].mxu0 %v1604
    %v1714 = vpop.f32.mrb[0].mxu0
    %v1715 = vadd.f32 0.0, %v1714
    %v1716 = vpop.f32.mrb[0].mxu0
    %1717 = vmatprep.mubr.f32.mxu0 0.0
    %1718 = vmatmul.mubr.f32.gmra.mrb[0].mxu0 %v1605
    %v1719 = vpop.f32.mrb[0].mxu0
    %v1720 = vadd.f32 0.0, %v1719
    %v1721 = vpop.f32.mrb[0].mxu0
    %1722 = vmatprep.mubr.f32.mxu0 0.0
    %1723 = vmatmul.mubr.f32.gmra.mrb[0].mxu0 %v1606
    %v1724 = vpop.f32.mrb[0].mxu0
    %v1725 = vadd.f32 0.0, %v1724
    %v1726 = vpop.f32.mrb[0].mxu0
    %1727 = vmatprep.mubr.f32.mxu0 0.0
    %1728 = vmatmul.mubr.f32.gmra.mrb[0].mxu0 %v1607
    %v1729 = vpop.f32.mrb[0].mxu0
    %v1730 = vadd.f32 0.0, %v1729
    %v1731 = vpop.f32.mrb[0].mxu0
    %1732 = vmatprep.mubr.f32.mxu0 0.0
    %1733 = vmatmul.mubr.f32.gmra.mrb[0].mxu0 %v1608
    %v1734 = vpop.f32.mrb[0].mxu0
    %v1735 = vadd.f32 0.0, %v1734
    %v1736 = vpop.f32.mrb[0].mxu0
    %1737 = vmatprep.mubr.f32.mxu0 0.0
    %1738 = vmatmul.mubr.f32.gmra.mrb[0].mxu0 %v1609
    %v1739 = vpop.f32.mrb[0].mxu0
    %v1740 = vadd.f32 0.0, %v1739
    %v1741 = vpop.f32.mrb[0].mxu0
    %1742 = vmatprep.mubr.f32.mxu0 0.0
    %1743 = vmatmul.mubr.f32.gmra.mrb[0].mxu0 %v1610
    %v1744 = vpop.f32.mrb[0].mxu0
    %v1745 = vadd.f32 0.0, %v1744
    %v1746 = vpop.f32.mrb[0].mxu0
    %1747 = vmatprep.mubr.f32.mxu0 0.0
    %1748 = vmatmul.mubr.f32.gmra.mrb[0].mxu0 %v1611
    %v1749 = vpop.f32.mrb[0].mxu0
    %v1750 = vadd.f32 0.0, %v1749
    %v1751 = vpop.f32.mrb[0].mxu0
    %1752 = vmatprep.mubr.f32.mxu0 0.0
    %1753 = vmatmul.mubr.f32.gmra.mrb[0].mxu0 %v1612
    %v1754 = vpop.f32.mrb[0].mxu0
    %v1755 = vadd.f32 0.0, %v1754
    %v1756 = vpop.f32.mrb[0].mxu0
    %1757 = vmatprep.mubr.f32.mxu0 0.0
    %1758 = vmatmul.mubr.f32.gmra.mrb[0].mxu0 %v1613
    %v1759 = vpop.f32.mrb[0].mxu0
    %v1760 = vadd.f32 0.0, %v1759
    %v1761 = vpop.f32.mrb[0].mxu0
    %1762 = vmatprep.mubr.f32.mxu0 0.0
    %1763 = vmatmul.mubr.f32.gmra.mrb[0].mxu0 %v1614
    %v1764 = vpop.f32.mrb[0].mxu0
    %v1765 = vadd.f32 0.0, %v1764
    %v1766 = vpop.f32.mrb[0].mxu0
    %1767 = vmatprep.mubr.f32.mxu0 0.0
    %1768 = vmatmul.mubr.f32.gmra.mrb[0].mxu0 %v1615
    %v1769 = vpop.f32.mrb[0].mxu0
    %v1770 = vadd.f32 0.0, %v1769
    %v1771 = vpop.f32.mrb[0].mxu0
    %1772 = vmatprep.mubr.f32.mxu0 0.0
    %1773 = vmatmul.mubr.f32.gmra.mrb[0].mxu0 %v1616
    %v1774 = vpop.f32.mrb[0].mxu0
    %v1775 = vadd.f32 0.0, %v1774
    %v1776 = vpop.f32.mrb[0].mxu0
    %1777 = vdwg.mxu0
    %v1778 = vld [vmem:[%s10] sm:$0x1]
    %v1780 = vlaneseq
    %v1781 = vshrl.u32 %v1780, 7
    %v1782 = vsub.s32 0, %v1781
    %v1783 = vrot.slane %v1778, %v1782
    %1785 = vmatprep.subr.mxu0 0.0
    %1786 = vmatpush1.msra.mxu0 %v1700
    %1787 = vmatprep.subr.mxu0 0.0
    %1788 = vmatpush1.msra.mxu0 %v1705
    %1789 = vmatprep.subr.mxu0 0.0
    %1790 = vmatpush1.msra.mxu0 %v1710
    %1791 = vmatprep.subr.mxu0 0.0
    %1792 = vmatpush1.msra.mxu0 %v1715
    %1793 = vmatprep.subr.mxu0 0.0
    %1794 = vmatpush1.msra.mxu0 %v1720
    %1795 = vmatprep.subr.mxu0 0.0
    %1796 = vmatpush1.msra.mxu0 %v1725
    %1797 = vmatprep.subr.mxu0 0.0
    %1798 = vmatpush1.msra.mxu0 %v1730
    %1799 = vmatprep.subr.mxu0 0.0
    %1800 = vmatpush1.msra.mxu0 %v1735
    %1801 = vmatprep.subr.mxu0 0.0
    %1802 = vmatpush1.msra.mxu0 %v1740
    %1803 = vmatprep.subr.mxu0 0.0
    %1804 = vmatpush1.msra.mxu0 %v1745
    %1805 = vmatprep.subr.mxu0 0.0
    %1806 = vmatpush1.msra.mxu0 %v1750
    %1807 = vmatprep.subr.mxu0 0.0
    %1808 = vmatpush1.msra.mxu0 %v1755
    %1809 = vmatprep.subr.mxu0 0.0
    %1810 = vmatpush1.msra.mxu0 %v1760
    %1811 = vmatprep.subr.mxu0 0.0
    %1812 = vmatpush1.msra.mxu0 %v1765
    %1813 = vmatprep.subr.mxu0 0.0
    %1814 = vmatpush1.msra.mxu0 %v1770
    %1815 = vmatprep.subr.mxu0 0.0
    %1816 = vmatpush1.msra.mxu0 %v1775
    %1817 = vmatprep.subr.mxu0 0.0
    %1818 = vmatpush1.msra.mxu0 0.0
    %1819 = vmatprep.subr.mxu0 0.0
    %1820 = vmatpush1.msra.mxu0 0.0
    %1821 = vmatprep.subr.mxu0 0.0
    %1822 = vmatpush1.msra.mxu0 0.0
    %1823 = vmatprep.subr.mxu0 0.0
    %1824 = vmatpush1.msra.mxu0 0.0
    %1825 = vmatprep.subr.mxu0 0.0
    %1826 = vmatpush1.msra.mxu0 0.0
    %1827 = vmatprep.subr.mxu0 0.0
    %1828 = vmatpush1.msra.mxu0 0.0
    %1829 = vmatprep.subr.mxu0 0.0
    %1830 = vmatpush1.msra.mxu0 0.0
    %1831 = vmatprep.subr.mxu0 0.0
    %1832 = vmatpush1.msra.mxu0 0.0
    %1833 = vmatprep.subr.mxu0 0.0
    %1834 = vmatpush1.msra.mxu0 0.0
    %1835 = vmatprep.subr.mxu0 0.0
    %1836 = vmatpush1.msra.mxu0 0.0
    %1837 = vmatprep.subr.mxu0 0.0
    %1838 = vmatpush1.msra.mxu0 0.0
    %1839 = vmatprep.subr.mxu0 0.0
    %1840 = vmatpush1.msra.mxu0 0.0
    %1841 = vmatprep.subr.mxu0 0.0
    %1842 = vmatpush1.msra.mxu0 0.0
    %1843 = vmatprep.subr.mxu0 0.0
    %1844 = vmatpush1.msra.mxu0 0.0
    %1845 = vmatprep.subr.mxu0 0.0
    %1846 = vmatpush1.msra.mxu0 0.0
    %1847 = vmatprep.subr.mxu0 0.0
    %1848 = vmatpush1.msra.mxu0 0.0
    %1849 = vmatprep.mubr.f32.mxu0 0.0
    %1850 = vmatmul.mubr.f32.gmra.mrb[0].mxu0 %v831
    %v1851 = vpop.f32.mrb[0].mxu0
    %v1852 = vadd.f32 %v1783, %v1851
    %v1853 = vpop.f32.mrb[0].mxu0
    %1854 = vmatprep.mubr.f32.mxu0 0.0
    %1855 = vmatmul.mubr.f32.gmra.mrb[0].mxu0 %v832
    %v1856 = vpop.f32.mrb[0].mxu0
    %v1857 = vadd.f32 %v1783, %v1856
    %v1858 = vpop.f32.mrb[0].mxu0
    %1859 = vmatprep.mubr.f32.mxu0 0.0
    %1860 = vmatmul.mubr.f32.gmra.mrb[0].mxu0 %v833
    %v1861 = vpop.f32.mrb[0].mxu0
    %v1862 = vadd.f32 %v1783, %v1861
    %v1863 = vpop.f32.mrb[0].mxu0
    %1864 = vmatprep.mubr.f32.mxu0 0.0
    %1865 = vmatmul.mubr.f32.gmra.mrb[0].mxu0 %v834
    %v1866 = vpop.f32.mrb[0].mxu0
    %v1867 = vadd.f32 %v1783, %v1866
    %v1868 = vpop.f32.mrb[0].mxu0
    %1869 = vmatprep.mubr.f32.mxu0 0.0
    %1870 = vmatmul.mubr.f32.gmra.mrb[0].mxu0 %v835
    %v1871 = vpop.f32.mrb[0].mxu0
    %v1872 = vadd.f32 %v1783, %v1871
    %v1873 = vpop.f32.mrb[0].mxu0
    %1874 = vmatprep.mubr.f32.mxu0 0.0
    %1875 = vmatmul.mubr.f32.gmra.mrb[0].mxu0 %v836
    %v1876 = vpop.f32.mrb[0].mxu0
    %v1877 = vadd.f32 %v1783, %v1876
    %v1878 = vpop.f32.mrb[0].mxu0
    %1879 = vmatprep.mubr.f32.mxu0 0.0
    %1880 = vmatmul.mubr.f32.gmra.mrb[0].mxu0 %v837
    %v1881 = vpop.f32.mrb[0].mxu0
    %v1882 = vadd.f32 %v1783, %v1881
    %v1883 = vpop.f32.mrb[0].mxu0
    %1884 = vmatprep.mubr.f32.mxu0 0.0
    %1885 = vmatmul.mubr.f32.gmra.mrb[0].mxu0 %v838
    %v1886 = vpop.f32.mrb[0].mxu0
    %v1887 = vadd.f32 %v1783, %v1886
    %v1888 = vpop.f32.mrb[0].mxu0
    %1889 = vmatprep.mubr.f32.mxu0 0.0
    %1890 = vmatmul.mubr.f32.gmra.mrb[0].mxu0 %v839
    %v1891 = vpop.f32.mrb[0].mxu0
    %v1892 = vadd.f32 %v1783, %v1891
    %v1893 = vpop.f32.mrb[0].mxu0
    %1894 = vmatprep.mubr.f32.mxu0 0.0
    %1895 = vmatmul.mubr.f32.gmra.mrb[0].mxu0 %v840
    %v1896 = vpop.f32.mrb[0].mxu0
    %v1897 = vadd.f32 %v1783, %v1896
    %v1898 = vpop.f32.mrb[0].mxu0
    %1899 = vmatprep.mubr.f32.mxu0 0.0
    %1900 = vmatmul.mubr.f32.gmra.mrb[0].mxu0 %v841
    %v1901 = vpop.f32.mrb[0].mxu0
    %v1902 = vadd.f32 %v1783, %v1901
    %v1903 = vpop.f32.mrb[0].mxu0
    %1904 = vmatprep.mubr.f32.mxu0 0.0
    %1905 = vmatmul.mubr.f32.gmra.mrb[0].mxu0 %v842
    %v1906 = vpop.f32.mrb[0].mxu0
    %v1907 = vadd.f32 %v1783, %v1906
    %v1908 = vpop.f32.mrb[0].mxu0
    %1909 = vmatprep.mubr.f32.mxu0 0.0
    %1910 = vmatmul.mubr.f32.gmra.mrb[0].mxu0 %v843
    %v1911 = vpop.f32.mrb[0].mxu0
    %v1912 = vadd.f32 %v1783, %v1911
    %v1913 = vpop.f32.mrb[0].mxu0
    %1914 = vmatprep.mubr.f32.mxu0 0.0
    %1915 = vmatmul.mubr.f32.gmra.mrb[0].mxu0 %v844
    %v1916 = vpop.f32.mrb[0].mxu0
    %v1917 = vadd.f32 %v1783, %v1916
    %v1918 = vpop.f32.mrb[0].mxu0
    %1919 = vmatprep.mubr.f32.mxu0 0.0
    %1920 = vmatmul.mubr.f32.gmra.mrb[0].mxu0 %v845
    %v1921 = vpop.f32.mrb[0].mxu0
    %v1922 = vadd.f32 %v1783, %v1921
    %v1923 = vpop.f32.mrb[0].mxu0
    %1924 = vmatprep.mubr.f32.mxu0 0.0
    %1925 = vmatmul.mubr.f32.gmra.mrb[0].mxu0 %v846
    %v1926 = vpop.f32.mrb[0].mxu0
    %v1927 = vadd.f32 %v1783, %v1926
    %v1928 = vpop.f32.mrb[0].mxu0
    %1929 = vdwg.mxu0
    %1930 = vst [vmem:[#allocation11] sm:$0xff] %v1852
    %1931 = vst [vmem:[#allocation11 + $0x8] sm:$0xff] %v1857
    %1932 = vst [vmem:[#allocation11 + $0x10] sm:$0xff] %v1862
    %1933 = vst [vmem:[#allocation11 + $0x18] sm:$0xff] %v1867
    %1934 = vst [vmem:[#allocation11 + $0x20] sm:$0xff] %v1872
    %1935 = vst [vmem:[#allocation11 + $0x28] sm:$0xff] %v1877
    %1936 = vst [vmem:[#allocation11 + $0x30] sm:$0xff] %v1882
    %1937 = vst [vmem:[#allocation11 + $0x38] sm:$0xff] %v1887
    %1938 = vst [vmem:[#allocation11 + $0x40] sm:$0xff] %v1892
    %1939 = vst [vmem:[#allocation11 + $0x48] sm:$0xff] %v1897
    %1940 = vst [vmem:[#allocation11 + $0x50] sm:$0xff] %v1902
    %1941 = vst [vmem:[#allocation11 + $0x58] sm:$0xff] %v1907
    %1942 = vst [vmem:[#allocation11 + $0x60] sm:$0xff] %v1912
    %1943 = vst [vmem:[#allocation11 + $0x68] sm:$0xff] %v1917
    %1944 = vst [vmem:[#allocation11 + $0x70] sm:$0xff] %v1922
    %1945 = vst [vmem:[#allocation11 + $0x78] sm:$0xff] %v1927
    // Predicated region
    $region66: #{tpu_custom_call.1} parent=1 // pred_check
      _
    $region67: #{tpu_custom_call.1} parent=1 // pred_check_branch
      %1947 = sbr.rel (0) target = $region69
    $region68: #{tpu_custom_call.1} parent=1 // pred_region
      %s1949 = ssub.s32 2048, 2048
      %1950 = vsyncadd [#allocation4], %s1949
      %s1951 = sshll.u32 [#allocation11], 4
      %s1952 = int_to_ptr.vmem [resolvable:$true] %s1951
      %1957 = dma.vmem_to_hbm [thread:$0]  %s1952, 2048, %s11, [#allocation4], 128, 128, 8
    $region69: #{tpu_custom_call.1} parent=1 // pred_fallthru
      _
    // Predicated region
    $region70: #{tpu_custom_call.1} parent=1 // pred_check
      _
    $region71: #{tpu_custom_call.1} parent=1 // pred_check_branch
      %1959 = sbr.rel (0) target = $region73
    $region72: #{tpu_custom_call.1} parent=1 // pred_region
      %1960 = dma.done [#allocation4], 2048
    $region73: #{tpu_custom_call.1} parent=1 // pred_fallthru
      _
    %1961 = vsyncpa [#allocation3], 1
    %1962 = vsyncpa [#allocation6], 1
    %1963 = vsyncpa [#allocation9], 1
    %1964 = vsyncpa [#allocation4], 1

</llo_original>
